<compile_context>
chip_gen: v5e
topology: v5e:2x2
jax: 0.10.0
libtpu: 0.0.40
codegen_flags: <defaults>
</compile_context>

<pallas_src>
import functools

import jax
import jax.numpy as jnp
from jax.experimental import pallas as pl
from jax.experimental.pallas import tpu as pltpu

LANE = 128
ROW_TILE = 512          # rows per grid step for large M (review: 512-1024 sweet spot)
MIN_SPLIT = 128         # below 2*MIN_SPLIT rows a single grid step is used
LRELU_SLOPE = 0.2
BN_EPS = 1e-5
VMEM_LIMIT = 32 * 1024 * 1024


def _round_up(x, m):
    return (x + m - 1) // m * m


# ------------------------------ Pallas kernel --------------------------------
def _matmul_bias_act_kernel(x_ref, w_ref, b_ref, o_ref, *, activation):
    """o = act(x @ w + b) for one row tile.  BN scale is pre-folded into w / b."""
    y = jnp.dot(x_ref[...], w_ref[...], preferred_element_type=jnp.float32)
    y = y + b_ref[...]                                  # bias kept f32
    if activation == "relu":
        y = jnp.maximum(y, 0.0)
    elif activation == "leaky_relu":
        y = jnp.where(y > 0, y, LRELU_SLOPE * y)
    elif activation == "sigmoid":
        # exp goes to the EUP; approx reciprocal keeps the divide off the VPU.
        y = pl.reciprocal(1.0 + jnp.exp(-y), approx=True)
    elif activation == "tanh":
        y = jnp.tanh(y)
    elif activation not in ("linear", "none", None):
        raise ValueError(f"unknown activation: {activation}")
    o_ref[...] = y.astype(o_ref.dtype)


def _pick_row_tiling(M):
    """(row_tile, padded_M): 512-row tiles for large M; an even 2-way 16-aligned split
    for mid-size M (so v7x's 2nd TensorCore gets a grid step); one step for tiny M."""
    if M >= 2 * ROW_TILE:
        return ROW_TILE, _round_up(M, ROW_TILE)
    if M >= 2 * MIN_SPLIT:
        tm = _round_up((M + 1) // 2, 16)
        return tm, 2 * tm
    return M, M


def fused_linear(x, w, b, activation, out_dtype):
    """act(x @ w + b) in one pallas_call.  x:[M,K], w:[K,N] (N % 128 == 0), b:[1,N] f32.
    Weights/bias are resident (constant index_map); row tiles are 'parallel'."""
    M, K = x.shape
    Kw, N = w.shape
    assert K == Kw and b.shape == (1, N) and N % LANE == 0
    tm, Mp = _pick_row_tiling(M)
    xp = x if Mp == M else jnp.pad(x, ((0, Mp - M), (0, 0)))

    out = pl.pallas_call(
        functools.partial(_matmul_bias_act_kernel, activation=activation),
        out_shape=jax.ShapeDtypeStruct((Mp, N), out_dtype),
        grid=(Mp // tm,),
        in_specs=[
            pl.BlockSpec((tm, K), lambda i: (i, 0)),    # activations / patches
            pl.BlockSpec((K, N), lambda i: (0, 0)),     # resident weights
            pl.BlockSpec((1, N), lambda i: (0, 0)),     # resident bias
        ],
        out_specs=pl.BlockSpec((tm, N), lambda i: (i, 0)),
        compiler_params=pltpu.CompilerParams(
            dimension_semantics=("parallel",),
            vmem_limit_bytes=VMEM_LIMIT),
    )(xp, w, b)
    return out if Mp == M else out[:M]


# ------------------------ layout plumbing (no FLOPs) --------------------------
def _pad1_im2col(h):
    """[B,H,W,C] -> zero-pad 1 -> 3x3 tap patches of the NON-upsampled input.
    Returns [B*H*W, 9*C].  Pure data movement; no 2x upsample is materialised."""
    B, H, W, C = h.shape
    hp = jnp.pad(h, ((0, 0), (1, 1), (1, 1), (0, 0)))
    taps = [hp[:, ty:ty + H, tx:tx + W, :] for ty in range(3) for tx in range(3)]
    return jnp.concatenate(taps, axis=-1).reshape(B * H * W, 9 * C)


def _depth_to_space2x(y, B, H, W, cout):
    """[B*H*W, >=4*cout] with parity-major columns -> [B, 2H, 2W, cout]."""
    y = y[:, :4 * cout].reshape(B, H, W, 2, 2, cout)
    return y.transpose(0, 1, 3, 2, 4, 5).reshape(B, 2 * H, 2 * W, cout)


# -------------------------------- full forward --------------------------------
def decoder_cnn_forward(x, kp, *, size_y, channel_y, final_activation="sigmoid"):
    """x: [B, dim_z]  ->  y: [B, channel_y, size_y, size_y] (NCHW, like PyTorch)."""
    B = x.shape[0]
    s = size_y // 8
    cd = kp["wfc"].dtype                         # compute dtype baked into the params

    # FC block: Linear -> BN1d(eval, folded) -> ReLU.  Columns pre-permuted to NHWC.
    h = fused_linear(x.astype(cd), kp["wfc"], kp["bfc"], "relu", cd)
    h = h.reshape(B, s, s, 128)                  # no transpose needed

    layers = ((kp["w1"], kp["b1"], 64, "leaky_relu"),
              (kp["w2"], kp["b2"], 32, "leaky_relu"),
              (kp["w3"], kp["b3"], channel_y, final_activation))
    for wm, bm, cout, act in layers:
        Bh, H, W, _ = h.shape
        patches = _pad1_im2col(h)                          # [B*H*W, 9*Cin], K unpadded
        y = fused_linear(patches, wm, bm, act, cd)         # [B*H*W, 4*cout (padded)]
        h = _depth_to_space2x(y, Bh, H, W, cout)           # sub-pixel x2 upsample

    return h.transpose(0, 3, 1, 2).astype(jnp.float32)     # NHWC -> NCHW


# --------------------------- parameter construction ---------------------------
def init_raw_params(key, dim_z, size_y, channel_y):
    """PyTorch-style random init + default BatchNorm affine / running stats."""
    s = size_y // 8
    fc_out = s * s * 128
    k = jax.random.split(key, 4)

    def _uniform(kk, shape, fan_in):
        bound = 1.0 / jnp.sqrt(jnp.float32(fan_in))
        return jax.random.uniform(kk, shape, jnp.float32, -bound, bound)

    def linear(kk, fin, fout):
        kw, kb = jax.random.split(kk)
        return _uniform(kw, (fin, fout), fin), _uniform(kb, (fout,), fin)

    def conv(kk, cin, cout, ksz=3):
        kw, kb = jax.random.split(kk)
        fan_in = cin * ksz * ksz
        return _uniform(kw, (ksz, ksz, cin, cout), fan_in), _uniform(kb, (cout,), fan_in)

    def bn(c):   # (gamma, beta, running_mean, running_var) -- PyTorch defaults
        return (jnp.ones((c,), jnp.float32), jnp.zeros((c,), jnp.float32),
                jnp.zeros((c,), jnp.float32), jnp.ones((c,), jnp.float32))

    wfc, bfc = linear(k[0], dim_z, fc_out)
    w1, b1 = conv(k[1], 128, 64)
    w2, b2 = conv(k[2], 64, 32)
    w3, b3 = conv(k[3], 32, channel_y)
    return dict(wfc=wfc, bfc=bfc, bn_fc=bn(fc_out),
                w1=w1, b1=b1, bn1=bn(64),
                w2=w2, b2=b2, bn2=bn(32),
                w3=w3, b3=b3)


def _bn_fold(gamma, beta, mean, var):
    scale = gamma / jnp.sqrt(var + BN_EPS)
    return scale, beta - mean * scale


# Parity tap-combination matrices A[p][tap, dy]: which of the original 3x3 taps (dy
# offset -1/0/+1) contribute to which tap over the NON-upsampled input for output
# parity p (same matrices are used for rows and columns).
_PARITY_A = (
    jnp.array([[1., 0., 0.], [0., 1., 1.], [0., 0., 0.]], jnp.float32),   # parity 0
    jnp.array([[0., 0., 0.], [1., 1., 0.], [0., 0., 1.]], jnp.float32),   # parity 1
)


def _subpixel_conv_params(w_hwio, bias, bn, compute_dtype):
    """Fold eval-mode BN and build the fused sub-pixel weight matrix.

    nearest-upsample(x2) -> conv3x3(pad=1) == conv3x3(pad=1) on the original input
    producing 4 parity copies of cout (each parity uses a 2x2 subset of the 3x3 taps
    with row/col-summed weights) followed by depth-to-space.
    Returns W:[9*cin, round_up(4*cout,128)] (compute dtype), b:[1, same] (f32).
    """
    kh, kw, cin, cout = w_hwio.shape
    if bn is not None:
        scale, shift = _bn_fold(*bn)
        w_hwio = w_hwio * scale[None, None, None, :]
        bias = bias * scale + shift
    blocks = []
    for py in range(2):
        for px in range(2):
            wp = jnp.einsum("td,se,dexy->tsxy", _PARITY_A[py], _PARITY_A[px], w_hwio)
            blocks.append(wp.reshape(kh * kw * cin, cout))    # tap-major, ci-minor
    wbig = jnp.concatenate(blocks, axis=1)                    # [9*cin, 4*cout]
    bbig = jnp.concatenate([bias] * 4)                        # parity-major, co-minor
    n = 4 * cout
    npad = _round_up(n, LANE)
    wpad = jnp.zeros((kh * kw * cin, npad), jnp.float32).at[:, :n].set(wbig)
    bpad = jnp.zeros((npad,), jnp.float32).at[:n].set(bbig)
    return wpad.astype(compute_dtype), bpad[None, :]


def build_kernel_params(raw, size_y, channel_y, compute_dtype=jnp.float32):
    """Fold eval-mode BN, build sub-pixel conv matrices, permute FC columns to NHWC,
    and cast weights to the compute dtype once (biases stay f32)."""
    s = size_y // 8
    sc, sh = _bn_fold(*raw["bn_fc"])
    wfc = raw["wfc"] * sc[None, :]
    bfc = raw["bfc"] * sc + sh
    # Permute columns: new col (i*s + j)*128 + c  <-  old col c*s*s + i*s + j (NCHW flat)
    ij = jnp.arange(s * s)
    c = jnp.arange(128)
    perm = (c[None, :] * (s * s) + ij[:, None]).reshape(-1)
    wfc = wfc[:, perm]
    bfc = bfc[perm]

    w1, b1 = _subpixel_conv_params(raw["w1"], raw["b1"], raw["bn1"], compute_dtype)
    w2, b2 = _subpixel_conv_params(raw["w2"], raw["b2"], raw["bn2"], compute_dtype)
    w3, b3 = _subpixel_conv_params(raw["w3"], raw["b3"], None, compute_dtype)
    return dict(wfc=wfc.astype(compute_dtype), bfc=bfc[None, :],
                w1=w1, b1=b1, w2=w2, b2=b2, w3=w3, b3=b3)


# ---------------------------- pure-JAX reference ------------------------------
def reference_forward(x, raw, *, size_y, channel_y, final_activation="sigmoid"):
    """Independent (un-decomposed, un-folded) reference of the same forward pass."""
    hp = jax.lax.Precision.HIGHEST
    s = size_y // 8
    B = x.shape[0]

    def bn_apply(h, bn):
        gamma, beta, mean, var = bn
        return (h - mean) / jnp.sqrt(var + BN_EPS) * gamma + beta

    h = jnp.dot(x, raw["wfc"], precision=hp) + raw["bfc"]
    h = jnp.maximum(bn_apply(h, raw["bn_fc"]), 0.0)
    h = h.reshape(B, 128, s, s).transpose(0, 2, 3, 1)          # NCHW view -> NHWC

    blocks = ((raw["w1"], raw["b1"], raw["bn1"], "leaky_relu"),
              (raw["w2"], raw["b2"], raw["bn2"], "leaky_relu"),
              (raw["w3"], raw["b3"], None, final_activation))
    for w, b, bn, act in blocks:
        h = jnp.repeat(jnp.repeat(h, 2, axis=1), 2, axis=2)    # nearest upsample x2
        h = jax.lax.conv_general_dilated(
            h, w, window_strides=(1, 1), padding="SAME",
            dimension_numbers=("NHWC", "HWIO", "NHWC"), precision=hp) + b
        if bn is not None:
            h = bn_apply(h, bn)
        if act == "leaky_relu":
            h = jnp.where(h > 0, h, LRELU_SLOPE * h)
        elif act == "sigmoid":
            h = 1.0 / (1.0 + jnp.exp(-h))
        elif act == "tanh":
            h = jnp.tanh(h)
    return h.transpose(0, 3, 1, 2)


# ------------------------------------ main ------------------------------------
if __name__ == "__main__":
    B, dim_z, size_y, channel_y = 2, 32, 16, 3   # out_cnn_size = 2 -> output [2,3,16,16]

    key = jax.random.PRNGKey(0)
    kx, kraw = jax.random.split(key)
    x = jax.random.normal(kx, (B, dim_z), jnp.float32)
    raw = init_raw_params(kraw, dim_z, size_y, channel_y)

    ref = reference_forward(x, raw, size_y=size_y, channel_y=channel_y,
                            final_activation="sigmoid")

    # f32-operand path
    kp_f32 = build_kernel_params(raw, size_y, channel_y, jnp.float32)
    fwd_f32 = jax.jit(lambda xx: decoder_cnn_forward(
        xx, kp_f32, size_y=size_y, channel_y=channel_y, final_activation="sigmoid"))
    out = jax.block_until_ready(fwd_f32(x))
    assert out.shape == (B, channel_y, size_y, size_y)
    assert jnp.allclose(out, ref, atol=5e-3, rtol=0.0), "f32 Pallas output mismatch"

    # bf16 operand + bf16 intermediate path (MXU is bf16-native on v5e/v6e/v7x;
    # bias-add / activations / accumulation stay f32 in-kernel).
    kp_bf16 = build_kernel_params(raw, size_y, channel_y, jnp.bfloat16)
    fwd_bf16 = jax.jit(lambda xx: decoder_cnn_forward(
        xx, kp_bf16, size_y=size_y, channel_y=channel_y, final_activation="sigmoid"))
    out_bf16 = jax.block_until_ready(fwd_bf16(x))
    assert out_bf16.shape == (B, channel_y, size_y, size_y)
    assert jnp.allclose(out_bf16, ref, atol=6e-2, rtol=0.0), "bf16 Pallas output mismatch"

    print("KERNEL_OK")
</pallas_src>

<mosaic_0001>
module attributes {stable_mosaic.version = 11 : i64} {
  func.func @_matmul_bias_act_kernel(%arg0: i32, %arg1: memref<2x32xf32, #tpu.memory_space<vmem>>, %arg2: memref<32x512xf32, #tpu.memory_space<vmem>>, %arg3: memref<1x512xf32, #tpu.memory_space<vmem>>, %arg4: memref<2x512xf32, #tpu.memory_space<vmem>>) attributes {dimension_semantics = [#tpu.dimension_semantics<parallel>], iteration_bounds = array<i64: 1>, scalar_prefetch = 0 : i64, scratch_operands = 0 : i64, tpu.core_type = #tpu.core_type<tc>, window_params = [{transform_indices = @transform_0, window_bounds = array<i64: 2, 32>}, {pipeline_mode = #tpu.pipeline_mode<synchronous>, transform_indices = @transform_1, window_bounds = array<i64: 32, 512>}, {pipeline_mode = #tpu.pipeline_mode<synchronous>, transform_indices = @transform_2, window_bounds = array<i64: 1, 512>}, {transform_indices = @transform_3, window_bounds = array<i64: 2, 512>}]} {
    %c0 = arith.constant 0 : index
    %c0_0 = arith.constant 0 : index
    %0 = vector.load %arg1[%c0, %c0_0] : memref<2x32xf32, #tpu.memory_space<vmem>>, vector<2x32xf32>
    %c0_1 = arith.constant 0 : index
    %c0_2 = arith.constant 0 : index
    %1 = vector.load %arg2[%c0_1, %c0_2] : memref<32x512xf32, #tpu.memory_space<vmem>>, vector<32x512xf32>
    %cst = arith.constant dense<0.000000e+00> : vector<2x512xf32>
    %2 = tpu.matmul %0, %1, %cst {dimension_numbers = #tpu.dot_dimension_numbers<[1], [0], [0], [1], [0, 0, 1, 1], [], []>} : vector<2x32xf32>, vector<32x512xf32>, vector<2x512xf32> -> vector<2x512xf32>
    %c0_3 = arith.constant 0 : index
    %c0_4 = arith.constant 0 : index
    %3 = vector.load %arg3[%c0_3, %c0_4] : memref<1x512xf32, #tpu.memory_space<vmem>>, vector<1x512xf32>
    %4 = vector.broadcast %3 : vector<1x512xf32> to vector<2x512xf32>
    %5 = arith.addf %2, %4 : vector<2x512xf32>
    %cst_5 = arith.constant 0.000000e+00 : f32
    %6 = vector.broadcast %cst_5 : f32 to vector<2x512xf32>
    %7 = arith.maximumf %5, %6 : vector<2x512xf32>
    %c0_6 = arith.constant 0 : index
    %c0_7 = arith.constant 0 : index
    %8 = vector.load %arg4[%c0_6, %c0_7] : memref<2x512xf32, #tpu.memory_space<vmem>>, vector<2x512xf32>
    tpu.vector_store %arg4[%c0_6, %c0_7], %7 {strides = array<i32>} : memref<2x512xf32, #tpu.memory_space<vmem>>, vector<2x512xf32>,
    return
  }
  func.func @transform_0(%arg0: i32) -> (i32, i32) {
    %c0_i32 = arith.constant 0 : i32
    %c0_i32_0 = arith.constant 0 : i32
    return %arg0, %c0_i32 : i32, i32
  }
  func.func @transform_1(%arg0: i32) -> (i32, i32) {
    %c0_i32 = arith.constant 0 : i32
    %c0_i32_0 = arith.constant 0 : i32
    %c0_i32_1 = arith.constant 0 : i32
    return %c0_i32, %c0_i32_0 : i32, i32
  }
  func.func @transform_2(%arg0: i32) -> (i32, i32) {
    %c0_i32 = arith.constant 0 : i32
    %c0_i32_0 = arith.constant 0 : i32
    %c0_i32_1 = arith.constant 0 : i32
    return %c0_i32, %c0_i32_0 : i32, i32
  }
  func.func @transform_3(%arg0: i32) -> (i32, i32) {
    %c0_i32 = arith.constant 0 : i32
    %c0_i32_0 = arith.constant 0 : i32
    return %arg0, %c0_i32 : i32, i32
  }
}

module attributes {stable_mosaic.version = 11 : i64} {
  func.func @_matmul_bias_act_kernel(%arg0: i32, %arg1: memref<32x576xf32, #tpu.memory_space<vmem>>, %arg2: memref<576x128xf32, #tpu.memory_space<vmem>>, %arg3: memref<1x128xf32, #tpu.memory_space<vmem>>, %arg4: memref<32x128xf32, #tpu.memory_space<vmem>>) attributes {dimension_semantics = [#tpu.dimension_semantics<parallel>], iteration_bounds = array<i64: 1>, scalar_prefetch = 0 : i64, scratch_operands = 0 : i64, tpu.core_type = #tpu.core_type<tc>, window_params = [{transform_indices = @transform_0, window_bounds = array<i64: 32, 576>}, {pipeline_mode = #tpu.pipeline_mode<synchronous>, transform_indices = @transform_1, window_bounds = array<i64: 576, 128>}, {pipeline_mode = #tpu.pipeline_mode<synchronous>, transform_indices = @transform_2, window_bounds = array<i64: 1, 128>}, {transform_indices = @transform_3, window_bounds = array<i64: 32, 128>}]} {
    %c0 = arith.constant 0 : index
    %c0_0 = arith.constant 0 : index
    %0 = vector.load %arg1[%c0, %c0_0] : memref<32x576xf32, #tpu.memory_space<vmem>>, vector<32x576xf32>
    %c0_1 = arith.constant 0 : index
    %c0_2 = arith.constant 0 : index
    %1 = vector.load %arg2[%c0_1, %c0_2] : memref<576x128xf32, #tpu.memory_space<vmem>>, vector<576x128xf32>
    %cst = arith.constant dense<0.000000e+00> : vector<32x128xf32>
    %2 = tpu.matmul %0, %1, %cst {dimension_numbers = #tpu.dot_dimension_numbers<[1], [0], [0], [1], [0, 0, 1, 1], [], []>} : vector<32x576xf32>, vector<576x128xf32>, vector<32x128xf32> -> vector<32x128xf32>
    %c0_3 = arith.constant 0 : index
    %c0_4 = arith.constant 0 : index
    %3 = vector.load %arg3[%c0_3, %c0_4] : memref<1x128xf32, #tpu.memory_space<vmem>>, vector<1x128xf32>
    %4 = vector.broadcast %3 : vector<1x128xf32> to vector<32x128xf32>
    %5 = arith.addf %2, %4 : vector<32x128xf32>
    %cst_5 = arith.constant 0.000000e+00 : f32
    %6 = vector.broadcast %cst_5 : f32 to vector<32x128xf32>
    %7 = arith.cmpf ogt, %5, %6 : vector<32x128xf32>
    %cst_6 = arith.constant 2.000000e-01 : f32
    %8 = vector.broadcast %cst_6 : f32 to vector<32x128xf32>
    %9 = arith.mulf %8, %5 : vector<32x128xf32>
    %10 = arith.select %7, %5, %9 : vector<32x128xi1>, vector<32x128xf32>
    %c0_7 = arith.constant 0 : index
    %c0_8 = arith.constant 0 : index
    %11 = vector.load %arg4[%c0_7, %c0_8] : memref<32x128xf32, #tpu.memory_space<vmem>>, vector<32x128xf32>
    tpu.vector_store %arg4[%c0_7, %c0_8], %10 {strides = array<i32>} : memref<32x128xf32, #tpu.memory_space<vmem>>, vector<32x128xf32>,
    return
  }
  func.func @transform_0(%arg0: i32) -> (i32, i32) {
    %c0_i32 = arith.constant 0 : i32
    %c0_i32_0 = arith.constant 0 : i32
    return %arg0, %c0_i32 : i32, i32
  }
  func.func @transform_1(%arg0: i32) -> (i32, i32) {
    %c0_i32 = arith.constant 0 : i32
    %c0_i32_0 = arith.constant 0 : i32
    %c0_i32_1 = arith.constant 0 : i32
    return %c0_i32, %c0_i32_0 : i32, i32
  }
  func.func @transform_2(%arg0: i32) -> (i32, i32) {
    %c0_i32 = arith.constant 0 : i32
    %c0_i32_0 = arith.constant 0 : i32
    %c0_i32_1 = arith.constant 0 : i32
    return %c0_i32, %c0_i32_0 : i32, i32
  }
  func.func @transform_3(%arg0: i32) -> (i32, i32) {
    %c0_i32 = arith.constant 0 : i32
    %c0_i32_0 = arith.constant 0 : i32
    return %arg0, %c0_i32 : i32, i32
  }
}

module attributes {stable_mosaic.version = 11 : i64} {
  func.func @_matmul_bias_act_kernel(%arg0: i32, %arg1: memref<8x1152xf32, #tpu.memory_space<vmem>>, %arg2: memref<1152x256xf32, #tpu.memory_space<vmem>>, %arg3: memref<1x256xf32, #tpu.memory_space<vmem>>, %arg4: memref<8x256xf32, #tpu.memory_space<vmem>>) attributes {dimension_semantics = [#tpu.dimension_semantics<parallel>], iteration_bounds = array<i64: 1>, scalar_prefetch = 0 : i64, scratch_operands = 0 : i64, tpu.core_type = #tpu.core_type<tc>, window_params = [{transform_indices = @transform_0, window_bounds = array<i64: 8, 1152>}, {pipeline_mode = #tpu.pipeline_mode<synchronous>, transform_indices = @transform_1, window_bounds = array<i64: 1152, 256>}, {pipeline_mode = #tpu.pipeline_mode<synchronous>, transform_indices = @transform_2, window_bounds = array<i64: 1, 256>}, {transform_indices = @transform_3, window_bounds = array<i64: 8, 256>}]} {
    %c0 = arith.constant 0 : index
    %c0_0 = arith.constant 0 : index
    %0 = vector.load %arg1[%c0, %c0_0] : memref<8x1152xf32, #tpu.memory_space<vmem>>, vector<8x1152xf32>
    %c0_1 = arith.constant 0 : index
    %c0_2 = arith.constant 0 : index
    %1 = vector.load %arg2[%c0_1, %c0_2] : memref<1152x256xf32, #tpu.memory_space<vmem>>, vector<1152x256xf32>
    %cst = arith.constant dense<0.000000e+00> : vector<8x256xf32>
    %2 = tpu.matmul %0, %1, %cst {dimension_numbers = #tpu.dot_dimension_numbers<[1], [0], [0], [1], [0, 0, 1, 1], [], []>} : vector<8x1152xf32>, vector<1152x256xf32>, vector<8x256xf32> -> vector<8x256xf32>
    %c0_3 = arith.constant 0 : index
    %c0_4 = arith.constant 0 : index
    %3 = vector.load %arg3[%c0_3, %c0_4] : memref<1x256xf32, #tpu.memory_space<vmem>>, vector<1x256xf32>
    %4 = vector.broadcast %3 : vector<1x256xf32> to vector<8x256xf32>
    %5 = arith.addf %2, %4 : vector<8x256xf32>
    %cst_5 = arith.constant 0.000000e+00 : f32
    %6 = vector.broadcast %cst_5 : f32 to vector<8x256xf32>
    %7 = arith.cmpf ogt, %5, %6 : vector<8x256xf32>
    %cst_6 = arith.constant 2.000000e-01 : f32
    %8 = vector.broadcast %cst_6 : f32 to vector<8x256xf32>
    %9 = arith.mulf %8, %5 : vector<8x256xf32>
    %10 = arith.select %7, %5, %9 : vector<8x256xi1>, vector<8x256xf32>
    %c0_7 = arith.constant 0 : index
    %c0_8 = arith.constant 0 : index
    %11 = vector.load %arg4[%c0_7, %c0_8] : memref<8x256xf32, #tpu.memory_space<vmem>>, vector<8x256xf32>
    tpu.vector_store %arg4[%c0_7, %c0_8], %10 {strides = array<i32>} : memref<8x256xf32, #tpu.memory_space<vmem>>, vector<8x256xf32>,
    return
  }
  func.func @transform_0(%arg0: i32) -> (i32, i32) {
    %c0_i32 = arith.constant 0 : i32
    %c0_i32_0 = arith.constant 0 : i32
    return %arg0, %c0_i32 : i32, i32
  }
  func.func @transform_1(%arg0: i32) -> (i32, i32) {
    %c0_i32 = arith.constant 0 : i32
    %c0_i32_0 = arith.constant 0 : i32
    %c0_i32_1 = arith.constant 0 : i32
    return %c0_i32, %c0_i32_0 : i32, i32
  }
  func.func @transform_2(%arg0: i32) -> (i32, i32) {
    %c0_i32 = arith.constant 0 : i32
    %c0_i32_0 = arith.constant 0 : i32
    %c0_i32_1 = arith.constant 0 : i32
    return %c0_i32, %c0_i32_0 : i32, i32
  }
  func.func @transform_3(%arg0: i32) -> (i32, i32) {
    %c0_i32 = arith.constant 0 : i32
    %c0_i32_0 = arith.constant 0 : i32
    return %arg0, %c0_i32 : i32, i32
  }
}

module attributes {stable_mosaic.version = 11 : i64} {
  func.func @_matmul_bias_act_kernel(%arg0: i32, %arg1: memref<128x288xf32, #tpu.memory_space<vmem>>, %arg2: memref<288x128xf32, #tpu.memory_space<vmem>>, %arg3: memref<1x128xf32, #tpu.memory_space<vmem>>, %arg4: memref<128x128xf32, #tpu.memory_space<vmem>>) attributes {dimension_semantics = [#tpu.dimension_semantics<parallel>], iteration_bounds = array<i64: 1>, scalar_prefetch = 0 : i64, scratch_operands = 0 : i64, tpu.core_type = #tpu.core_type<tc>, window_params = [{transform_indices = @transform_0, window_bounds = array<i64: 128, 288>}, {pipeline_mode = #tpu.pipeline_mode<synchronous>, transform_indices = @transform_1, window_bounds = array<i64: 288, 128>}, {pipeline_mode = #tpu.pipeline_mode<synchronous>, transform_indices = @transform_2, window_bounds = array<i64: 1, 128>}, {transform_indices = @transform_3, window_bounds = array<i64: 128, 128>}]} {
    %c0 = arith.constant 0 : index
    %c0_0 = arith.constant 0 : index
    %0 = vector.load %arg1[%c0, %c0_0] : memref<128x288xf32, #tpu.memory_space<vmem>>, vector<128x288xf32>
    %c0_1 = arith.constant 0 : index
    %c0_2 = arith.constant 0 : index
    %1 = vector.load %arg2[%c0_1, %c0_2] : memref<288x128xf32, #tpu.memory_space<vmem>>, vector<288x128xf32>
    %cst = arith.constant dense<0.000000e+00> : vector<128x128xf32>
    %2 = tpu.matmul %0, %1, %cst {dimension_numbers = #tpu.dot_dimension_numbers<[1], [0], [0], [1], [0, 0, 1, 1], [], []>} : vector<128x288xf32>, vector<288x128xf32>, vector<128x128xf32> -> vector<128x128xf32>
    %c0_3 = arith.constant 0 : index
    %c0_4 = arith.constant 0 : index
    %3 = vector.load %arg3[%c0_3, %c0_4] : memref<1x128xf32, #tpu.memory_space<vmem>>, vector<1x128xf32>
    %4 = vector.broadcast %3 : vector<1x128xf32> to vector<128x128xf32>
    %5 = arith.addf %2, %4 : vector<128x128xf32>
    %cst_5 = arith.constant 0.000000e+00 : f32
    %6 = vector.broadcast %cst_5 : f32 to vector<128x128xf32>
    %7 = arith.subf %6, %5 : vector<128x128xf32>
    %8 = math.exp %7 : vector<128x128xf32>
    %cst_6 = arith.constant 1.000000e+00 : f32
    %9 = vector.broadcast %cst_6 : f32 to vector<128x128xf32>
    %10 = arith.addf %9, %8 : vector<128x128xf32>
    %11 = tpu.reciprocal %10 {approx = true} : vector<128x128xf32> -> vector<128x128xf32>
    %c0_7 = arith.constant 0 : index
    %c0_8 = arith.constant 0 : index
    %12 = vector.load %arg4[%c0_7, %c0_8] : memref<128x128xf32, #tpu.memory_space<vmem>>, vector<128x128xf32>
    tpu.vector_store %arg4[%c0_7, %c0_8], %11 {strides = array<i32>} : memref<128x128xf32, #tpu.memory_space<vmem>>, vector<128x128xf32>,
    return
  }
  func.func @transform_0(%arg0: i32) -> (i32, i32) {
    %c0_i32 = arith.constant 0 : i32
    %c0_i32_0 = arith.constant 0 : i32
    return %arg0, %c0_i32 : i32, i32
  }
  func.func @transform_1(%arg0: i32) -> (i32, i32) {
    %c0_i32 = arith.constant 0 : i32
    %c0_i32_0 = arith.constant 0 : i32
    %c0_i32_1 = arith.constant 0 : i32
    return %c0_i32, %c0_i32_0 : i32, i32
  }
  func.func @transform_2(%arg0: i32) -> (i32, i32) {
    %c0_i32 = arith.constant 0 : i32
    %c0_i32_0 = arith.constant 0 : i32
    %c0_i32_1 = arith.constant 0 : i32
    return %c0_i32, %c0_i32_0 : i32, i32
  }
  func.func @transform_3(%arg0: i32) -> (i32, i32) {
    %c0_i32 = arith.constant 0 : i32
    %c0_i32_0 = arith.constant 0 : i32
    return %arg0, %c0_i32 : i32, i32
  }
}

</mosaic_0001>

<llo_original>
// kernel: _lambda_.4
$region0: #{_lambda_.4}
  #allocation0 [shape = 'u32[]', space=smem, size = 0x4, offset = 0x4, fixed_abs, tag = 'smem constant byte address 0x4 - core index']
  #allocation1 [shape = 'u32[72,128]{1,0:T(1,128)}', space=vmem, size = 0x9000, scoped, tag = 'internal scratch']
  %s0 = inlined_call_operand.hbm [shape: f32[2,32], index: 0, kind: input, shape index: {}]
  %s1 = inlined_call_operand.hbm [shape: f32[32,512], index: 1, kind: input, shape index: {}]
  %s2 = inlined_call_operand.hbm [shape: f32[1,512], index: 2, kind: input, shape index: {}]
  %s3 = inlined_call_operand.vmem [shape: f32[2,512], index: 3, kind: output, shape index: {}]
  %s4 = sld [smem:[#allocation0]]
  $region34: #{_lambda_.4} parent=0
    _
  %s6 = ssub.s32 1, %s4
  %s7 = scalar_select 0, %s6, %s4
  $region1: #{_lambda_.4} parent=0
    #allocation2 [shape = 'u8[1024]{0}', space=vmem, size = 0x400, scoped, tag = 'input window, operand 0, single buffered']
    #allocation3 [shape = 's32[1]{0}', space=sflag, size = 0x4, scoped, tag = 'scoped memory for _lambda_.4']
    #allocation4 [shape = 'u8[65536]{0}', space=vmem, size = 0x10000, scoped, tag = 'input window, operand 1, single buffered']
    #allocation5 [shape = 's32[1]{0}', space=sflag, size = 0x4, scoped, tag = 'scoped memory for _lambda_.4']
    #allocation6 [shape = 'u8[2048]{0}', space=vmem, size = 0x800, scoped, tag = 'input window, operand 2, single buffered']
    %8 = vsyncpa [#allocation3], 0
    %9 = vsyncpa [#allocation5], 0
    // Predicated region
    $region2: #{_lambda_.4} parent=1 // pred_check
      _
    $region3: #{_lambda_.4} parent=1 // pred_check_branch
      %11 = sbr.rel (0) target = $region5
    $region4: #{_lambda_.4} parent=1 // pred_region
      %13 = vsyncadd [#allocation3], 0
      %s15 = sshll.u32 %s0, 4
      %s16 = int_to_ptr.hbm [resolvable:$true] %s15
      %s17 = sshll.u32 [#allocation2], 4
      %s18 = int_to_ptr.vmem [resolvable:$true] %s17
      %20 = dma.hbm_to_vmem [thread:$0]  %s16, 32, %s18, [#allocation3]
    $region5: #{_lambda_.4} parent=1 // pred_fallthru
      _
    // Predicated region
    $region6: #{_lambda_.4} parent=1 // pred_check
      _
    $region7: #{_lambda_.4} parent=1 // pred_check_branch
      %22 = sbr.rel (0) target = $region9
    $region8: #{_lambda_.4} parent=1 // pred_region
      %24 = vsyncadd [#allocation5], 0
      %s25 = sshll.u32 %s1, 4
      %s26 = int_to_ptr.hbm [resolvable:$true] %s25
      %s27 = sshll.u32 [#allocation4], 4
      %s28 = int_to_ptr.vmem [resolvable:$true] %s27
      %33 = dma.hbm_to_vmem [thread:$0]  %s26, 2048, %s28, [#allocation5], 512, 512, 32
    $region9: #{_lambda_.4} parent=1 // pred_fallthru
      _
    // Predicated region
    $region10: #{_lambda_.4} parent=1 // pred_check
      _
    $region11: #{_lambda_.4} parent=1 // pred_check_branch
      %35 = sbr.rel (0) target = $region13
    $region12: #{_lambda_.4} parent=1 // pred_region
      %37 = vsyncadd [#allocation5], 0
      %s39 = sshll.u32 %s2, 4
      %s40 = int_to_ptr.hbm [resolvable:$true] %s39
      %s41 = sshll.u32 [#allocation6], 4
      %s42 = int_to_ptr.vmem [resolvable:$true] %s41
      %44 = dma.hbm_to_vmem [thread:$0]  %s40, 64, %s42, [#allocation5]
    $region13: #{_lambda_.4} parent=1 // pred_fallthru
      _
    // Predicated region
    $region14: #{_lambda_.4} parent=1 // pred_check
      _
    $region15: #{_lambda_.4} parent=1 // pred_check_branch
      %46 = sbr.rel (0) target = $region17
    $region16: #{_lambda_.4} parent=1 // pred_region
      %48 = dma.done [#allocation3], 32
    $region17: #{_lambda_.4} parent=1 // pred_fallthru
      _
    // Predicated region
    $region18: #{_lambda_.4} parent=1 // pred_check
      _
    $region19: #{_lambda_.4} parent=1 // pred_check_branch
      %50 = sbr.rel (0) target = $region21
    $region20: #{_lambda_.4} parent=1 // pred_region
      %52 = dma.done [#allocation5], 2048
    $region21: #{_lambda_.4} parent=1 // pred_fallthru
      _
    // Predicated region
    $region22: #{_lambda_.4} parent=1 // pred_check
      _
    $region23: #{_lambda_.4} parent=1 // pred_check_branch
      %54 = sbr.rel (0) target = $region25
    $region24: #{_lambda_.4} parent=1 // pred_region
      %56 = dma.done [#allocation5], 64
    $region25: #{_lambda_.4} parent=1 // pred_fallthru
      _
    %v57 = vld [vmem:[#allocation2] sm:$0x3]
    %v58 = vld [vmem:[#allocation4] sm:$0xff]
    %v59 = vld [vmem:[#allocation4 + $0x8] sm:$0xff]
    %v60 = vld [vmem:[#allocation4 + $0x10] sm:$0xff]
    %v61 = vld [vmem:[#allocation4 + $0x18] sm:$0xff]
    %v62 = vld [vmem:[#allocation4 + $0x20] sm:$0xff]
    %v63 = vld [vmem:[#allocation4 + $0x28] sm:$0xff]
    %v64 = vld [vmem:[#allocation4 + $0x30] sm:$0xff]
    %v65 = vld [vmem:[#allocation4 + $0x38] sm:$0xff]
    %v66 = vld [vmem:[#allocation4 + $0x40] sm:$0xff]
    %v67 = vld [vmem:[#allocation4 + $0x48] sm:$0xff]
    %v68 = vld [vmem:[#allocation4 + $0x50] sm:$0xff]
    %v69 = vld [vmem:[#allocation4 + $0x58] sm:$0xff]
    %v70 = vld [vmem:[#allocation4 + $0x60] sm:$0xff]
    %v71 = vld [vmem:[#allocation4 + $0x68] sm:$0xff]
    %v72 = vld [vmem:[#allocation4 + $0x70] sm:$0xff]
    %v73 = vld [vmem:[#allocation4 + $0x78] sm:$0xff]
    %v74 = vld [vmem:[#allocation6] sm:$0xf]
    %v76 = vperm.slane %v74, 0
    %v77 = vperm.slane %v74, 1
    %v78 = vperm.slane %v74, 2
    %v79 = vperm.slane %v74, 3
    %vm84 = vcmask 261120
    %v86 = vsel %vm84, %v57, 0
    %88 = vmatpush.msra.mxu0 0.0
    %89 = vmatpush.msra.mxu0 0.0
    %90 = vmatpush.msra.mxu0 0.0
    %91 = vmatpush.msra.mxu0 0.0
    %92 = vmatpush.msra.mxu0 0.0
    %93 = vmatpush.msra.mxu0 0.0
    %94 = vmatpush.msra.mxu0 0.0
    %95 = vmatpush.msra.mxu0 0.0
    %96 = vmatpush.msra.mxu0 0.0
    %97 = vmatpush.msra.mxu0 0.0
    %98 = vmatpush.msra.mxu0 0.0
    %99 = vmatpush.msra.mxu0 0.0
    %100 = vmatpush.msra.mxu0 %v70
    %101 = vmatpush.msra.mxu0 %v66
    %102 = vmatpush.msra.mxu0 %v62
    %103 = vmatpush.msra.mxu0 %v58
    %104 = vmatmul.f32.gmra.mxu0 %v86
    %v105 = vpop.f32.mrf.mxu0
    %v106 = vadd.f32 %v76, %v105
    %107 = vdwg.mxu0
    %108 = vmatpush.msra.mxu0 0.0
    %109 = vmatpush.msra.mxu0 0.0
    %110 = vmatpush.msra.mxu0 0.0
    %111 = vmatpush.msra.mxu0 0.0
    %112 = vmatpush.msra.mxu0 0.0
    %113 = vmatpush.msra.mxu0 0.0
    %114 = vmatpush.msra.mxu0 0.0
    %115 = vmatpush.msra.mxu0 0.0
    %116 = vmatpush.msra.mxu0 0.0
    %117 = vmatpush.msra.mxu0 0.0
    %118 = vmatpush.msra.mxu0 0.0
    %119 = vmatpush.msra.mxu0 0.0
    %120 = vmatpush.msra.mxu0 %v71
    %121 = vmatpush.msra.mxu0 %v67
    %122 = vmatpush.msra.mxu0 %v63
    %123 = vmatpush.msra.mxu0 %v59
    %124 = vmatmul.f32.gmra.mxu0 %v86
    %v125 = vpop.f32.mrf.mxu0
    %v126 = vadd.f32 %v77, %v125
    %127 = vdwg.mxu0
    %128 = vmatpush.msra.mxu0 0.0
    %129 = vmatpush.msra.mxu0 0.0
    %130 = vmatpush.msra.mxu0 0.0
    %131 = vmatpush.msra.mxu0 0.0
    %132 = vmatpush.msra.mxu0 0.0
    %133 = vmatpush.msra.mxu0 0.0
    %134 = vmatpush.msra.mxu0 0.0
    %135 = vmatpush.msra.mxu0 0.0
    %136 = vmatpush.msra.mxu0 0.0
    %137 = vmatpush.msra.mxu0 0.0
    %138 = vmatpush.msra.mxu0 0.0
    %139 = vmatpush.msra.mxu0 0.0
    %140 = vmatpush.msra.mxu0 %v72
    %141 = vmatpush.msra.mxu0 %v68
    %142 = vmatpush.msra.mxu0 %v64
    %143 = vmatpush.msra.mxu0 %v60
    %144 = vmatmul.f32.gmra.mxu0 %v86
    %v145 = vpop.f32.mrf.mxu0
    %v146 = vadd.f32 %v78, %v145
    %147 = vdwg.mxu0
    %148 = vmatpush.msra.mxu0 0.0
    %149 = vmatpush.msra.mxu0 0.0
    %150 = vmatpush.msra.mxu0 0.0
    %151 = vmatpush.msra.mxu0 0.0
    %152 = vmatpush.msra.mxu0 0.0
    %153 = vmatpush.msra.mxu0 0.0
    %154 = vmatpush.msra.mxu0 0.0
    %155 = vmatpush.msra.mxu0 0.0
    %156 = vmatpush.msra.mxu0 0.0
    %157 = vmatpush.msra.mxu0 0.0
    %158 = vmatpush.msra.mxu0 0.0
    %159 = vmatpush.msra.mxu0 0.0
    %160 = vmatpush.msra.mxu0 %v73
    %161 = vmatpush.msra.mxu0 %v69
    %162 = vmatpush.msra.mxu0 %v65
    %163 = vmatpush.msra.mxu0 %v61
    %164 = vmatmul.f32.gmra.mxu0 %v86
    %v165 = vpop.f32.mrf.mxu0
    %v166 = vadd.f32 %v79, %v165
    %167 = vdwg.mxu0
    %v168 = vmax.f32 %v106, 0.0
    %v169 = vmax.f32 %v126, 0.0
    %v170 = vmax.f32 %v146, 0.0
    %v171 = vmax.f32 %v166, 0.0
    %v176 = vrot.slane %v169, 6
    %v177 = vrot.slane %v170, 4
    %v178 = vrot.slane %v171, 2
    %vm179 = vcmask 1041408
    %v180 = vsel %vm179, %v168, %v176
    %vm181 = vcmask 1045508
    %v182 = vsel %vm181, %v177, %v178
    %vm183 = vcmask 1043456
    %v184 = vsel %vm183, %v180, %v182
    %186 = vst [vmem:[%s3] sm:$0xff] %v184
    // Predicated region
    $region26: #{_lambda_.4} parent=1 // pred_check
      _
    $region27: #{_lambda_.4} parent=1 // pred_check_branch
      %188 = sbr.rel (0) target = $region29
    $region28: #{_lambda_.4} parent=1 // pred_region
      _
    $region29: #{_lambda_.4} parent=1 // pred_fallthru
      _
    // Predicated region
    $region30: #{_lambda_.4} parent=1 // pred_check
      _
    $region31: #{_lambda_.4} parent=1 // pred_check_branch
      %190 = sbr.rel (0) target = $region33
    $region32: #{_lambda_.4} parent=1 // pred_region
      _
    $region33: #{_lambda_.4} parent=1 // pred_fallthru
      _
    %191 = vsyncpa [#allocation3], 1
    %192 = vsyncpa [#allocation5], 1

// kernel: _lambda_.6
$region0: #{_lambda_.6}
  #allocation0 [shape = 'u32[]', space=smem, size = 0x4, offset = 0x4, fixed_abs, tag = 'smem constant byte address 0x4 - core index']
  #allocation1 [shape = 'u32[72,128]{1,0:T(1,128)}', space=vmem, size = 0x9000, scoped, tag = 'internal scratch']
  %s0 = inlined_call_operand.vmem [shape: f32[32,576], index: 0, kind: input, shape index: {}]
  %s1 = inlined_call_operand.hbm [shape: f32[576,128], index: 1, kind: input, shape index: {}]
  %s2 = inlined_call_operand.hbm [shape: f32[1,128], index: 2, kind: input, shape index: {}]
  %s3 = inlined_call_operand.vmem [shape: f32[32,128], index: 3, kind: output, shape index: {}]
  %s4 = sld [smem:[#allocation0]]
  $region30: #{_lambda_.6} parent=0
    _
  %s6 = ssub.s32 1, %s4
  %s7 = scalar_select 0, %s6, %s4
  $region1: #{_lambda_.6} parent=0
    #allocation2 [shape = 'u8[294912]{0}', space=vmem, size = 0x48000, scoped, tag = 'input window, operand 1, single buffered']
    #allocation3 [shape = 's32[1]{0}', space=sflag, size = 0x4, scoped, tag = 'scoped memory for _lambda_.6']
    #allocation4 [shape = 'u8[512]{0}', space=vmem, size = 0x400, scoped, tag = 'input window, operand 2, single buffered']
    #allocation5 [shape = 's32[1]{0}', space=sflag, size = 0x4, scoped, tag = 'scoped memory for _lambda_.6']
    %8 = vsyncpa [#allocation3], 0
    %9 = vsyncpa [#allocation5], 0
    // Predicated region
    $region2: #{_lambda_.6} parent=1 // pred_check
      _
    $region3: #{_lambda_.6} parent=1 // pred_check_branch
      %11 = sbr.rel (0) target = $region5
    $region4: #{_lambda_.6} parent=1 // pred_region
      _
    $region5: #{_lambda_.6} parent=1 // pred_fallthru
      _
    // Predicated region
    $region6: #{_lambda_.6} parent=1 // pred_check
      _
    $region7: #{_lambda_.6} parent=1 // pred_check_branch
      %13 = sbr.rel (0) target = $region9
    $region8: #{_lambda_.6} parent=1 // pred_region
      %15 = vsyncadd [#allocation3], 0
      %s16 = sshll.u32 %s1, 4
      %s17 = int_to_ptr.hbm [resolvable:$true] %s16
      %s18 = sshll.u32 [#allocation2], 4
      %s19 = int_to_ptr.vmem [resolvable:$true] %s18
      %24 = dma.hbm_to_vmem [thread:$0]  %s17, 9216, %s19, [#allocation3], 128, 128, 8
    $region9: #{_lambda_.6} parent=1 // pred_fallthru
      _
    // Predicated region
    $region10: #{_lambda_.6} parent=1 // pred_check
      _
    $region11: #{_lambda_.6} parent=1 // pred_check_branch
      %26 = sbr.rel (0) target = $region13
    $region12: #{_lambda_.6} parent=1 // pred_region
      %28 = vsyncadd [#allocation5], 0
      %s30 = sshll.u32 %s2, 4
      %s31 = int_to_ptr.hbm [resolvable:$true] %s30
      %s32 = sshll.u32 [#allocation4], 4
      %s33 = int_to_ptr.vmem [resolvable:$true] %s32
      %35 = dma.hbm_to_vmem [thread:$0]  %s31, 16, %s33, [#allocation5]
    $region13: #{_lambda_.6} parent=1 // pred_fallthru
      _
    // Predicated region
    $region14: #{_lambda_.6} parent=1 // pred_check
      _
    $region15: #{_lambda_.6} parent=1 // pred_check_branch
      %37 = sbr.rel (0) target = $region17
    $region16: #{_lambda_.6} parent=1 // pred_region
      %39 = dma.done [#allocation3], 9216
    $region17: #{_lambda_.6} parent=1 // pred_fallthru
      _
    // Predicated region
    $region18: #{_lambda_.6} parent=1 // pred_check
      _
    $region19: #{_lambda_.6} parent=1 // pred_check_branch
      %41 = sbr.rel (0) target = $region21
    $region20: #{_lambda_.6} parent=1 // pred_region
      %43 = dma.done [#allocation5], 16
    $region21: #{_lambda_.6} parent=1 // pred_fallthru
      _
    %v44 = vld [vmem:[%s0] sm:$0xff]
    %v45 = vld [vmem:[%s0 + $0x8] sm:$0xff]
    %v46 = vld [vmem:[%s0 + $0x10] sm:$0xff]
    %v47 = vld [vmem:[%s0 + $0x18] sm:$0xff]
    %v48 = vld [vmem:[%s0 + $0x20] sm:$0xff]
    %v49 = vld [vmem:[%s0 + $0x28] sm:$0xff]
    %v50 = vld [vmem:[%s0 + $0x30] sm:$0xff]
    %v51 = vld [vmem:[%s0 + $0x38] sm:$0xff]
    %v52 = vld [vmem:[%s0 + $0x40] sm:$0xff]
    %v53 = vld [vmem:[%s0 + $0x48] sm:$0xff]
    %v54 = vld [vmem:[%s0 + $0x50] sm:$0xff]
    %v55 = vld [vmem:[%s0 + $0x58] sm:$0xff]
    %v56 = vld [vmem:[%s0 + $0x60] sm:$0xff]
    %v57 = vld [vmem:[%s0 + $0x68] sm:$0xff]
    %v58 = vld [vmem:[%s0 + $0x70] sm:$0xff]
    %v59 = vld [vmem:[%s0 + $0x78] sm:$0xff]
    %v60 = vld [vmem:[%s0 + $0x80] sm:$0xff]
    %v61 = vld [vmem:[%s0 + $0x88] sm:$0xff]
    %v62 = vld [vmem:[%s0 + $0x90] sm:$0xff]
    %v63 = vld [vmem:[%s0 + $0x98] sm:$0xff]
    %v64 = vld [vmem:[#allocation2] sm:$0xff]
    %v65 = vld [vmem:[#allocation2 + $0x8] sm:$0xff]
    %v66 = vld [vmem:[#allocation2 + $0x10] sm:$0xff]
    %v67 = vld [vmem:[#allocation2 + $0x18] sm:$0xff]
    %v68 = vld [vmem:[#allocation2 + $0x20] sm:$0xff]
    %v69 = vld [vmem:[#allocation2 + $0x28] sm:$0xff]
    %v70 = vld [vmem:[#allocation2 + $0x30] sm:$0xff]
    %v71 = vld [vmem:[#allocation2 + $0x38] sm:$0xff]
    %v72 = vld [vmem:[#allocation2 + $0x40] sm:$0xff]
    %v73 = vld [vmem:[#allocation2 + $0x48] sm:$0xff]
    %v74 = vld [vmem:[#allocation2 + $0x50] sm:$0xff]
    %v75 = vld [vmem:[#allocation2 + $0x58] sm:$0xff]
    %v76 = vld [vmem:[#allocation2 + $0x60] sm:$0xff]
    %v77 = vld [vmem:[#allocation2 + $0x68] sm:$0xff]
    %v78 = vld [vmem:[#allocation2 + $0x70] sm:$0xff]
    %v79 = vld [vmem:[#allocation2 + $0x78] sm:$0xff]
    %v80 = vld [vmem:[#allocation2 + $0x80] sm:$0xff]
    %v81 = vld [vmem:[#allocation2 + $0x88] sm:$0xff]
    %v82 = vld [vmem:[#allocation2 + $0x90] sm:$0xff]
    %v83 = vld [vmem:[#allocation2 + $0x98] sm:$0xff]
    %v84 = vld [vmem:[#allocation2 + $0xa0] sm:$0xff]
    %v85 = vld [vmem:[#allocation2 + $0xa8] sm:$0xff]
    %v86 = vld [vmem:[#allocation2 + $0xb0] sm:$0xff]
    %v87 = vld [vmem:[#allocation2 + $0xb8] sm:$0xff]
    %v88 = vld [vmem:[#allocation2 + $0xc0] sm:$0xff]
    %v89 = vld [vmem:[#allocation2 + $0xc8] sm:$0xff]
    %v90 = vld [vmem:[#allocation2 + $0xd0] sm:$0xff]
    %v91 = vld [vmem:[#allocation2 + $0xd8] sm:$0xff]
    %v92 = vld [vmem:[#allocation2 + $0xe0] sm:$0xff]
    %v93 = vld [vmem:[#allocation2 + $0xe8] sm:$0xff]
    %v94 = vld [vmem:[#allocation2 + $0xf0] sm:$0xff]
    %v95 = vld [vmem:[#allocation2 + $0xf8] sm:$0xff]
    %v96 = vld [vmem:[#allocation2 + $0x100] sm:$0xff]
    %v97 = vld [vmem:[#allocation2 + $0x108] sm:$0xff]
    %v98 = vld [vmem:[#allocation2 + $0x110] sm:$0xff]
    %v99 = vld [vmem:[#allocation2 + $0x118] sm:$0xff]
    %v100 = vld [vmem:[#allocation2 + $0x120] sm:$0xff]
    %v101 = vld [vmem:[#allocation2 + $0x128] sm:$0xff]
    %v102 = vld [vmem:[#allocation2 + $0x130] sm:$0xff]
    %v103 = vld [vmem:[#allocation2 + $0x138] sm:$0xff]
    %v104 = vld [vmem:[#allocation2 + $0x140] sm:$0xff]
    %v105 = vld [vmem:[#allocation2 + $0x148] sm:$0xff]
    %v106 = vld [vmem:[#allocation2 + $0x150] sm:$0xff]
    %v107 = vld [vmem:[#allocation2 + $0x158] sm:$0xff]
    %v108 = vld [vmem:[#allocation2 + $0x160] sm:$0xff]
    %v109 = vld [vmem:[#allocation2 + $0x168] sm:$0xff]
    %v110 = vld [vmem:[#allocation2 + $0x170] sm:$0xff]
    %v111 = vld [vmem:[#allocation2 + $0x178] sm:$0xff]
    %v112 = vld [vmem:[#allocation2 + $0x180] sm:$0xff]
    %v113 = vld [vmem:[#allocation2 + $0x188] sm:$0xff]
    %v114 = vld [vmem:[#allocation2 + $0x190] sm:$0xff]
    %v115 = vld [vmem:[#allocation2 + $0x198] sm:$0xff]
    %v116 = vld [vmem:[#allocation2 + $0x1a0] sm:$0xff]
    %v117 = vld [vmem:[#allocation2 + $0x1a8] sm:$0xff]
    %v118 = vld [vmem:[#allocation2 + $0x1b0] sm:$0xff]
    %v119 = vld [vmem:[#allocation2 + $0x1b8] sm:$0xff]
    %v120 = vld [vmem:[#allocation2 + $0x1c0] sm:$0xff]
    %v121 = vld [vmem:[#allocation2 + $0x1c8] sm:$0xff]
    %v122 = vld [vmem:[#allocation2 + $0x1d0] sm:$0xff]
    %v123 = vld [vmem:[#allocation2 + $0x1d8] sm:$0xff]
    %v124 = vld [vmem:[#allocation2 + $0x1e0] sm:$0xff]
    %v125 = vld [vmem:[#allocation2 + $0x1e8] sm:$0xff]
    %v126 = vld [vmem:[#allocation2 + $0x1f0] sm:$0xff]
    %v127 = vld [vmem:[#allocation2 + $0x1f8] sm:$0xff]
    %v128 = vld [vmem:[#allocation2 + $0x200] sm:$0xff]
    %v129 = vld [vmem:[#allocation2 + $0x208] sm:$0xff]
    %v130 = vld [vmem:[#allocation2 + $0x210] sm:$0xff]
    %v131 = vld [vmem:[#allocation2 + $0x218] sm:$0xff]
    %v132 = vld [vmem:[#allocation2 + $0x220] sm:$0xff]
    %v133 = vld [vmem:[#allocation2 + $0x228] sm:$0xff]
    %v134 = vld [vmem:[#allocation2 + $0x230] sm:$0xff]
    %v135 = vld [vmem:[#allocation2 + $0x238] sm:$0xff]
    %v136 = vld [vmem:[#allocation4] sm:$0x1]
    %v138 = vperm.slane %v136, 0
    %vm140 = vcmask 523264
    %v142 = vsel %vm140, %v48, 0
    %v145 = vsel %vm140, %v53, 0
    %v148 = vsel %vm140, %v58, 0
    %v151 = vsel %vm140, %v63, 0
    %153 = vmatpush.msra.mxu0 %v79
    %154 = vmatpush.msra.mxu0 %v78
    %155 = vmatpush.msra.mxu0 %v77
    %156 = vmatpush.msra.mxu0 %v76
    %157 = vmatpush.msra.mxu0 %v75
    %158 = vmatpush.msra.mxu0 %v74
    %159 = vmatpush.msra.mxu0 %v73
    %160 = vmatpush.msra.mxu0 %v72
    %161 = vmatpush.msra.mxu0 %v71
    %162 = vmatpush.msra.mxu0 %v70
    %163 = vmatpush.msra.mxu0 %v69
    %164 = vmatpush.msra.mxu0 %v68
    %165 = vmatpush.msra.mxu0 %v67
    %166 = vmatpush.msra.mxu0 %v66
    %167 = vmatpush.msra.mxu0 %v65
    %168 = vmatpush.msra.mxu0 %v64
    %169 = vmatmul.f32.gmra.mxu0 %v44
    %v170 = vpop.f32.mrf.mxu0
    %v171 = vadd.f32 %v138, %v170
    %172 = vmatmul.f32.gmra.mxu0 %v49
    %v173 = vpop.f32.mrf.mxu0
    %v174 = vadd.f32 %v138, %v173
    %175 = vmatmul.f32.gmra.mxu0 %v54
    %v176 = vpop.f32.mrf.mxu0
    %v177 = vadd.f32 %v138, %v176
    %178 = vmatmul.f32.gmra.mxu0 %v59
    %v179 = vpop.f32.mrf.mxu0
    %v180 = vadd.f32 %v138, %v179
    %181 = vdwg.mxu0
    %182 = vmatpush.msra.mxu0 %v95
    %183 = vmatpush.msra.mxu0 %v94
    %184 = vmatpush.msra.mxu0 %v93
    %185 = vmatpush.msra.mxu0 %v92
    %186 = vmatpush.msra.mxu0 %v91
    %187 = vmatpush.msra.mxu0 %v90
    %188 = vmatpush.msra.mxu0 %v89
    %189 = vmatpush.msra.mxu0 %v88
    %190 = vmatpush.msra.mxu0 %v87
    %191 = vmatpush.msra.mxu0 %v86
    %192 = vmatpush.msra.mxu0 %v85
    %193 = vmatpush.msra.mxu0 %v84
    %194 = vmatpush.msra.mxu0 %v83
    %195 = vmatpush.msra.mxu0 %v82
    %196 = vmatpush.msra.mxu0 %v81
    %197 = vmatpush.msra.mxu0 %v80
    %198 = vmatmul.f32.gmra.mxu0 %v45
    %v199 = vpop.f32.mrf.mxu0
    %v200 = vadd.f32 %v171, %v199
    %201 = vmatmul.f32.gmra.mxu0 %v50
    %v202 = vpop.f32.mrf.mxu0
    %v203 = vadd.f32 %v174, %v202
    %204 = vmatmul.f32.gmra.mxu0 %v55
    %v205 = vpop.f32.mrf.mxu0
    %v206 = vadd.f32 %v177, %v205
    %207 = vmatmul.f32.gmra.mxu0 %v60
    %v208 = vpop.f32.mrf.mxu0
    %v209 = vadd.f32 %v180, %v208
    %210 = vdwg.mxu0
    %211 = vmatpush.msra.mxu0 %v111
    %212 = vmatpush.msra.mxu0 %v110
    %213 = vmatpush.msra.mxu0 %v109
    %214 = vmatpush.msra.mxu0 %v108
    %215 = vmatpush.msra.mxu0 %v107
    %216 = vmatpush.msra.mxu0 %v106
    %217 = vmatpush.msra.mxu0 %v105
    %218 = vmatpush.msra.mxu0 %v104
    %219 = vmatpush.msra.mxu0 %v103
    %220 = vmatpush.msra.mxu0 %v102
    %221 = vmatpush.msra.mxu0 %v101
    %222 = vmatpush.msra.mxu0 %v100
    %223 = vmatpush.msra.mxu0 %v99
    %224 = vmatpush.msra.mxu0 %v98
    %225 = vmatpush.msra.mxu0 %v97
    %226 = vmatpush.msra.mxu0 %v96
    %227 = vmatmul.f32.gmra.mxu0 %v46
    %v228 = vpop.f32.mrf.mxu0
    %v229 = vadd.f32 %v200, %v228
    %230 = vmatmul.f32.gmra.mxu0 %v51
    %v231 = vpop.f32.mrf.mxu0
    %v232 = vadd.f32 %v203, %v231
    %233 = vmatmul.f32.gmra.mxu0 %v56
    %v234 = vpop.f32.mrf.mxu0
    %v235 = vadd.f32 %v206, %v234
    %236 = vmatmul.f32.gmra.mxu0 %v61
    %v237 = vpop.f32.mrf.mxu0
    %v238 = vadd.f32 %v209, %v237
    %239 = vdwg.mxu0
    %240 = vmatpush.msra.mxu0 %v127
    %241 = vmatpush.msra.mxu0 %v126
    %242 = vmatpush.msra.mxu0 %v125
    %243 = vmatpush.msra.mxu0 %v124
    %244 = vmatpush.msra.mxu0 %v123
    %245 = vmatpush.msra.mxu0 %v122
    %246 = vmatpush.msra.mxu0 %v121
    %247 = vmatpush.msra.mxu0 %v120
    %248 = vmatpush.msra.mxu0 %v119
    %249 = vmatpush.msra.mxu0 %v118
    %250 = vmatpush.msra.mxu0 %v117
    %251 = vmatpush.msra.mxu0 %v116
    %252 = vmatpush.msra.mxu0 %v115
    %253 = vmatpush.msra.mxu0 %v114
    %254 = vmatpush.msra.mxu0 %v113
    %255 = vmatpush.msra.mxu0 %v112
    %256 = vmatmul.f32.gmra.mxu0 %v47
    %v257 = vpop.f32.mrf.mxu0
    %v258 = vadd.f32 %v229, %v257
    %259 = vmatmul.f32.gmra.mxu0 %v52
    %v260 = vpop.f32.mrf.mxu0
    %v261 = vadd.f32 %v232, %v260
    %262 = vmatmul.f32.gmra.mxu0 %v57
    %v263 = vpop.f32.mrf.mxu0
    %v264 = vadd.f32 %v235, %v263
    %265 = vmatmul.f32.gmra.mxu0 %v62
    %v266 = vpop.f32.mrf.mxu0
    %v267 = vadd.f32 %v238, %v266
    %268 = vdwg.mxu0
    %269 = vmatpush.msra.mxu0 0.0
    %270 = vmatpush.msra.mxu0 0.0
    %271 = vmatpush.msra.mxu0 0.0
    %272 = vmatpush.msra.mxu0 0.0
    %273 = vmatpush.msra.mxu0 0.0
    %274 = vmatpush.msra.mxu0 0.0
    %275 = vmatpush.msra.mxu0 0.0
    %276 = vmatpush.msra.mxu0 0.0
    %277 = vmatpush.msra.mxu0 %v135
    %278 = vmatpush.msra.mxu0 %v134
    %279 = vmatpush.msra.mxu0 %v133
    %280 = vmatpush.msra.mxu0 %v132
    %281 = vmatpush.msra.mxu0 %v131
    %282 = vmatpush.msra.mxu0 %v130
    %283 = vmatpush.msra.mxu0 %v129
    %284 = vmatpush.msra.mxu0 %v128
    %285 = vmatmul.f32.gmra.mxu0 %v142
    %v286 = vpop.f32.mrf.mxu0
    %v287 = vadd.f32 %v258, %v286
    %288 = vmatmul.f32.gmra.mxu0 %v145
    %v289 = vpop.f32.mrf.mxu0
    %v290 = vadd.f32 %v261, %v289
    %291 = vmatmul.f32.gmra.mxu0 %v148
    %v292 = vpop.f32.mrf.mxu0
    %v293 = vadd.f32 %v264, %v292
    %294 = vmatmul.f32.gmra.mxu0 %v151
    %v295 = vpop.f32.mrf.mxu0
    %v296 = vadd.f32 %v267, %v295
    %297 = vdwg.mxu0
    %vm298 = vcmp.gt.f32.partialorder %v287, 0.0
    %vm299 = vcmp.gt.f32.partialorder %v290, 0.0
    %vm300 = vcmp.gt.f32.partialorder %v293, 0.0
    %vm301 = vcmp.gt.f32.partialorder %v296, 0.0
    %v302 = vmul.f32 %v287, 0.2
    %v303 = vmul.f32 %v290, 0.2
    %v304 = vmul.f32 %v293, 0.2
    %v305 = vmul.f32 %v296, 0.2
    %v306 = vsel %vm298, %v287, %v302
    %v307 = vsel %vm299, %v290, %v303
    %v308 = vsel %vm300, %v293, %v304
    %v309 = vsel %vm301, %v296, %v305
    %310 = vst [vmem:[%s3] sm:$0xff] %v306
    %311 = vst [vmem:[%s3 + $0x8] sm:$0xff] %v307
    %312 = vst [vmem:[%s3 + $0x10] sm:$0xff] %v308
    %313 = vst [vmem:[%s3 + $0x18] sm:$0xff] %v309
    // Predicated region
    $region22: #{_lambda_.6} parent=1 // pred_check
      _
    $region23: #{_lambda_.6} parent=1 // pred_check_branch
      %315 = sbr.rel (0) target = $region25
    $region24: #{_lambda_.6} parent=1 // pred_region
      _
    $region25: #{_lambda_.6} parent=1 // pred_fallthru
      _
    // Predicated region
    $region26: #{_lambda_.6} parent=1 // pred_check
      _
    $region27: #{_lambda_.6} parent=1 // pred_check_branch
      %317 = sbr.rel (0) target = $region29
    $region28: #{_lambda_.6} parent=1 // pred_region
      _
    $region29: #{_lambda_.6} parent=1 // pred_fallthru
      _
    %318 = vsyncpa [#allocation3], 1
    %319 = vsyncpa [#allocation5], 1

// kernel: _lambda_.5
$region0: #{_lambda_.5}
  #allocation0 [shape = 'u32[]', space=smem, size = 0x4, offset = 0x4, fixed_abs, tag = 'smem constant byte address 0x4 - core index']
  #allocation1 [shape = 'u32[72,128]{1,0:T(1,128)}', space=vmem, size = 0x9000, scoped, tag = 'internal scratch']
  %s0 = inlined_call_operand.vmem [shape: f32[8,1152], index: 0, kind: input, shape index: {}]
  %s1 = inlined_call_operand.hbm [shape: f32[1152,256], index: 1, kind: input, shape index: {}]
  %s2 = inlined_call_operand.hbm [shape: f32[1,256], index: 2, kind: input, shape index: {}]
  %s3 = inlined_call_operand.vmem [shape: f32[8,256], index: 3, kind: output, shape index: {}]
  %s4 = sld [smem:[#allocation0]]
  $region30: #{_lambda_.5} parent=0
    _
  %s6 = ssub.s32 1, %s4
  %s7 = scalar_select 0, %s6, %s4
  $region1: #{_lambda_.5} parent=0
    #allocation2 [shape = 'u8[1179648]{0}', space=vmem, size = 0x120000, scoped, tag = 'input window, operand 1, single buffered']
    #allocation3 [shape = 's32[1]{0}', space=sflag, size = 0x4, scoped, tag = 'scoped memory for _lambda_.5']
    #allocation4 [shape = 'u8[1024]{0}', space=vmem, size = 0x400, scoped, tag = 'input window, operand 2, single buffered']
    #allocation5 [shape = 's32[1]{0}', space=sflag, size = 0x4, scoped, tag = 'scoped memory for _lambda_.5']
    %8 = vsyncpa [#allocation3], 0
    %9 = vsyncpa [#allocation5], 0
    // Predicated region
    $region2: #{_lambda_.5} parent=1 // pred_check
      _
    $region3: #{_lambda_.5} parent=1 // pred_check_branch
      %11 = sbr.rel (0) target = $region5
    $region4: #{_lambda_.5} parent=1 // pred_region
      _
    $region5: #{_lambda_.5} parent=1 // pred_fallthru
      _
    // Predicated region
    $region6: #{_lambda_.5} parent=1 // pred_check
      _
    $region7: #{_lambda_.5} parent=1 // pred_check_branch
      %13 = sbr.rel (0) target = $region9
    $region8: #{_lambda_.5} parent=1 // pred_region
      %15 = vsyncadd [#allocation3], 0
      %s16 = sshll.u32 %s1, 4
      %s17 = int_to_ptr.hbm [resolvable:$true] %s16
      %s18 = sshll.u32 [#allocation2], 4
      %s19 = int_to_ptr.vmem [resolvable:$true] %s18
      %24 = dma.hbm_to_vmem [thread:$0]  %s17, 36864, %s19, [#allocation3], 256, 256, 16
    $region9: #{_lambda_.5} parent=1 // pred_fallthru
      _
    // Predicated region
    $region10: #{_lambda_.5} parent=1 // pred_check
      _
    $region11: #{_lambda_.5} parent=1 // pred_check_branch
      %26 = sbr.rel (0) target = $region13
    $region12: #{_lambda_.5} parent=1 // pred_region
      %28 = vsyncadd [#allocation5], 0
      %s30 = sshll.u32 %s2, 4
      %s31 = int_to_ptr.hbm [resolvable:$true] %s30
      %s32 = sshll.u32 [#allocation4], 4
      %s33 = int_to_ptr.vmem [resolvable:$true] %s32
      %35 = dma.hbm_to_vmem [thread:$0]  %s31, 32, %s33, [#allocation5]
    $region13: #{_lambda_.5} parent=1 // pred_fallthru
      _
    // Predicated region
    $region14: #{_lambda_.5} parent=1 // pred_check
      _
    $region15: #{_lambda_.5} parent=1 // pred_check_branch
      %37 = sbr.rel (0) target = $region17
    $region16: #{_lambda_.5} parent=1 // pred_region
      %39 = dma.done [#allocation3], 36864
    $region17: #{_lambda_.5} parent=1 // pred_fallthru
      _
    // Predicated region
    $region18: #{_lambda_.5} parent=1 // pred_check
      _
    $region19: #{_lambda_.5} parent=1 // pred_check_branch
      %41 = sbr.rel (0) target = $region21
    $region20: #{_lambda_.5} parent=1 // pred_region
      %43 = dma.done [#allocation5], 32
    $region21: #{_lambda_.5} parent=1 // pred_fallthru
      _
    %v44 = vld [vmem:[%s0] sm:$0xff]
    %v45 = vld [vmem:[%s0 + $0x8] sm:$0xff]
    %v46 = vld [vmem:[%s0 + $0x10] sm:$0xff]
    %v47 = vld [vmem:[%s0 + $0x18] sm:$0xff]
    %v48 = vld [vmem:[%s0 + $0x20] sm:$0xff]
    %v49 = vld [vmem:[%s0 + $0x28] sm:$0xff]
    %v50 = vld [vmem:[%s0 + $0x30] sm:$0xff]
    %v51 = vld [vmem:[%s0 + $0x38] sm:$0xff]
    %v52 = vld [vmem:[%s0 + $0x40] sm:$0xff]
    %v53 = vld [vmem:[#allocation2] sm:$0xff]
    %v54 = vld [vmem:[#allocation2 + $0x8] sm:$0xff]
    %v55 = vld [vmem:[#allocation2 + $0x10] sm:$0xff]
    %v56 = vld [vmem:[#allocation2 + $0x18] sm:$0xff]
    %v57 = vld [vmem:[#allocation2 + $0x20] sm:$0xff]
    %v58 = vld [vmem:[#allocation2 + $0x28] sm:$0xff]
    %v59 = vld [vmem:[#allocation2 + $0x30] sm:$0xff]
    %v60 = vld [vmem:[#allocation2 + $0x38] sm:$0xff]
    %v61 = vld [vmem:[#allocation2 + $0x40] sm:$0xff]
    %v62 = vld [vmem:[#allocation2 + $0x48] sm:$0xff]
    %v63 = vld [vmem:[#allocation2 + $0x50] sm:$0xff]
    %v64 = vld [vmem:[#allocation2 + $0x58] sm:$0xff]
    %v65 = vld [vmem:[#allocation2 + $0x60] sm:$0xff]
    %v66 = vld [vmem:[#allocation2 + $0x68] sm:$0xff]
    %v67 = vld [vmem:[#allocation2 + $0x70] sm:$0xff]
    %v68 = vld [vmem:[#allocation2 + $0x78] sm:$0xff]
    %v69 = vld [vmem:[#allocation2 + $0x80] sm:$0xff]
    %v70 = vld [vmem:[#allocation2 + $0x88] sm:$0xff]
    %v71 = vld [vmem:[#allocation2 + $0x90] sm:$0xff]
    %v72 = vld [vmem:[#allocation2 + $0x98] sm:$0xff]
    %v73 = vld [vmem:[#allocation2 + $0xa0] sm:$0xff]
    %v74 = vld [vmem:[#allocation2 + $0xa8] sm:$0xff]
    %v75 = vld [vmem:[#allocation2 + $0xb0] sm:$0xff]
    %v76 = vld [vmem:[#allocation2 + $0xb8] sm:$0xff]
    %v77 = vld [vmem:[#allocation2 + $0xc0] sm:$0xff]
    %v78 = vld [vmem:[#allocation2 + $0xc8] sm:$0xff]
    %v79 = vld [vmem:[#allocation2 + $0xd0] sm:$0xff]
    %v80 = vld [vmem:[#allocation2 + $0xd8] sm:$0xff]
    %v81 = vld [vmem:[#allocation2 + $0xe0] sm:$0xff]
    %v82 = vld [vmem:[#allocation2 + $0xe8] sm:$0xff]
    %v83 = vld [vmem:[#allocation2 + $0xf0] sm:$0xff]
    %v84 = vld [vmem:[#allocation2 + $0xf8] sm:$0xff]
    %v85 = vld [vmem:[#allocation2 + $0x100] sm:$0xff]
    %v86 = vld [vmem:[#allocation2 + $0x108] sm:$0xff]
    %v87 = vld [vmem:[#allocation2 + $0x110] sm:$0xff]
    %v88 = vld [vmem:[#allocation2 + $0x118] sm:$0xff]
    %v89 = vld [vmem:[#allocation2 + $0x120] sm:$0xff]
    %v90 = vld [vmem:[#allocation2 + $0x128] sm:$0xff]
    %v91 = vld [vmem:[#allocation2 + $0x130] sm:$0xff]
    %v92 = vld [vmem:[#allocation2 + $0x138] sm:$0xff]
    %v93 = vld [vmem:[#allocation2 + $0x140] sm:$0xff]
    %v94 = vld [vmem:[#allocation2 + $0x148] sm:$0xff]
    %v95 = vld [vmem:[#allocation2 + $0x150] sm:$0xff]
    %v96 = vld [vmem:[#allocation2 + $0x158] sm:$0xff]
    %v97 = vld [vmem:[#allocation2 + $0x160] sm:$0xff]
    %v98 = vld [vmem:[#allocation2 + $0x168] sm:$0xff]
    %v99 = vld [vmem:[#allocation2 + $0x170] sm:$0xff]
    %v100 = vld [vmem:[#allocation2 + $0x178] sm:$0xff]
    %v101 = vld [vmem:[#allocation2 + $0x180] sm:$0xff]
    %v102 = vld [vmem:[#allocation2 + $0x188] sm:$0xff]
    %v103 = vld [vmem:[#allocation2 + $0x190] sm:$0xff]
    %v104 = vld [vmem:[#allocation2 + $0x198] sm:$0xff]
    %v105 = vld [vmem:[#allocation2 + $0x1a0] sm:$0xff]
    %v106 = vld [vmem:[#allocation2 + $0x1a8] sm:$0xff]
    %v107 = vld [vmem:[#allocation2 + $0x1b0] sm:$0xff]
    %v108 = vld [vmem:[#allocation2 + $0x1b8] sm:$0xff]
    %v109 = vld [vmem:[#allocation2 + $0x1c0] sm:$0xff]
    %v110 = vld [vmem:[#allocation2 + $0x1c8] sm:$0xff]
    %v111 = vld [vmem:[#allocation2 + $0x1d0] sm:$0xff]
    %v112 = vld [vmem:[#allocation2 + $0x1d8] sm:$0xff]
    %v113 = vld [vmem:[#allocation2 + $0x1e0] sm:$0xff]
    %v114 = vld [vmem:[#allocation2 + $0x1e8] sm:$0xff]
    %v115 = vld [vmem:[#allocation2 + $0x1f0] sm:$0xff]
    %v116 = vld [vmem:[#allocation2 + $0x1f8] sm:$0xff]
    %v117 = vld [vmem:[#allocation2 + $0x200] sm:$0xff]
    %v118 = vld [vmem:[#allocation2 + $0x208] sm:$0xff]
    %v119 = vld [vmem:[#allocation2 + $0x210] sm:$0xff]
    %v120 = vld [vmem:[#allocation2 + $0x218] sm:$0xff]
    %v121 = vld [vmem:[#allocation2 + $0x220] sm:$0xff]
    %v122 = vld [vmem:[#allocation2 + $0x228] sm:$0xff]
    %v123 = vld [vmem:[#allocation2 + $0x230] sm:$0xff]
    %v124 = vld [vmem:[#allocation2 + $0x238] sm:$0xff]
    %v125 = vld [vmem:[#allocation2 + $0x240] sm:$0xff]
    %v126 = vld [vmem:[#allocation2 + $0x248] sm:$0xff]
    %v127 = vld [vmem:[#allocation2 + $0x250] sm:$0xff]
    %v128 = vld [vmem:[#allocation2 + $0x258] sm:$0xff]
    %v129 = vld [vmem:[#allocation2 + $0x260] sm:$0xff]
    %v130 = vld [vmem:[#allocation2 + $0x268] sm:$0xff]
    %v131 = vld [vmem:[#allocation2 + $0x270] sm:$0xff]
    %v132 = vld [vmem:[#allocation2 + $0x278] sm:$0xff]
    %v133 = vld [vmem:[#allocation2 + $0x280] sm:$0xff]
    %v134 = vld [vmem:[#allocation2 + $0x288] sm:$0xff]
    %v135 = vld [vmem:[#allocation2 + $0x290] sm:$0xff]
    %v136 = vld [vmem:[#allocation2 + $0x298] sm:$0xff]
    %v137 = vld [vmem:[#allocation2 + $0x2a0] sm:$0xff]
    %v138 = vld [vmem:[#allocation2 + $0x2a8] sm:$0xff]
    %v139 = vld [vmem:[#allocation2 + $0x2b0] sm:$0xff]
    %v140 = vld [vmem:[#allocation2 + $0x2b8] sm:$0xff]
    %v141 = vld [vmem:[#allocation2 + $0x2c0] sm:$0xff]
    %v142 = vld [vmem:[#allocation2 + $0x2c8] sm:$0xff]
    %v143 = vld [vmem:[#allocation2 + $0x2d0] sm:$0xff]
    %v144 = vld [vmem:[#allocation2 + $0x2d8] sm:$0xff]
    %v145 = vld [vmem:[#allocation2 + $0x2e0] sm:$0xff]
    %v146 = vld [vmem:[#allocation2 + $0x2e8] sm:$0xff]
    %v147 = vld [vmem:[#allocation2 + $0x2f0] sm:$0xff]
    %v148 = vld [vmem:[#allocation2 + $0x2f8] sm:$0xff]
    %v149 = vld [vmem:[#allocation2 + $0x300] sm:$0xff]
    %v150 = vld [vmem:[#allocation2 + $0x308] sm:$0xff]
    %v151 = vld [vmem:[#allocation2 + $0x310] sm:$0xff]
    %v152 = vld [vmem:[#allocation2 + $0x318] sm:$0xff]
    %v153 = vld [vmem:[#allocation2 + $0x320] sm:$0xff]
    %v154 = vld [vmem:[#allocation2 + $0x328] sm:$0xff]
    %v155 = vld [vmem:[#allocation2 + $0x330] sm:$0xff]
    %v156 = vld [vmem:[#allocation2 + $0x338] sm:$0xff]
    %v157 = vld [vmem:[#allocation2 + $0x340] sm:$0xff]
    %v158 = vld [vmem:[#allocation2 + $0x348] sm:$0xff]
    %v159 = vld [vmem:[#allocation2 + $0x350] sm:$0xff]
    %v160 = vld [vmem:[#allocation2 + $0x358] sm:$0xff]
    %v161 = vld [vmem:[#allocation2 + $0x360] sm:$0xff]
    %v162 = vld [vmem:[#allocation2 + $0x368] sm:$0xff]
    %v163 = vld [vmem:[#allocation2 + $0x370] sm:$0xff]
    %v164 = vld [vmem:[#allocation2 + $0x378] sm:$0xff]
    %v165 = vld [vmem:[#allocation2 + $0x380] sm:$0xff]
    %v166 = vld [vmem:[#allocation2 + $0x388] sm:$0xff]
    %v167 = vld [vmem:[#allocation2 + $0x390] sm:$0xff]
    %v168 = vld [vmem:[#allocation2 + $0x398] sm:$0xff]
    %v169 = vld [vmem:[#allocation2 + $0x3a0] sm:$0xff]
    %v170 = vld [vmem:[#allocation2 + $0x3a8] sm:$0xff]
    %v171 = vld [vmem:[#allocation2 + $0x3b0] sm:$0xff]
    %v172 = vld [vmem:[#allocation2 + $0x3b8] sm:$0xff]
    %v173 = vld [vmem:[#allocation2 + $0x3c0] sm:$0xff]
    %v174 = vld [vmem:[#allocation2 + $0x3c8] sm:$0xff]
    %v175 = vld [vmem:[#allocation2 + $0x3d0] sm:$0xff]
    %v176 = vld [vmem:[#allocation2 + $0x3d8] sm:$0xff]
    %v177 = vld [vmem:[#allocation2 + $0x3e0] sm:$0xff]
    %v178 = vld [vmem:[#allocation2 + $0x3e8] sm:$0xff]
    %v179 = vld [vmem:[#allocation2 + $0x3f0] sm:$0xff]
    %v180 = vld [vmem:[#allocation2 + $0x3f8] sm:$0xff]
    %v181 = vld [vmem:[#allocation2 + $0x400] sm:$0xff]
    %v182 = vld [vmem:[#allocation2 + $0x408] sm:$0xff]
    %v183 = vld [vmem:[#allocation2 + $0x410] sm:$0xff]
    %v184 = vld [vmem:[#allocation2 + $0x418] sm:$0xff]
    %v185 = vld [vmem:[#allocation2 + $0x420] sm:$0xff]
    %v186 = vld [vmem:[#allocation2 + $0x428] sm:$0xff]
    %v187 = vld [vmem:[#allocation2 + $0x430] sm:$0xff]
    %v188 = vld [vmem:[#allocation2 + $0x438] sm:$0xff]
    %v189 = vld [vmem:[#allocation2 + $0x440] sm:$0xff]
    %v190 = vld [vmem:[#allocation2 + $0x448] sm:$0xff]
    %v191 = vld [vmem:[#allocation2 + $0x450] sm:$0xff]
    %v192 = vld [vmem:[#allocation2 + $0x458] sm:$0xff]
    %v193 = vld [vmem:[#allocation2 + $0x460] sm:$0xff]
    %v194 = vld [vmem:[#allocation2 + $0x468] sm:$0xff]
    %v195 = vld [vmem:[#allocation2 + $0x470] sm:$0xff]
    %v196 = vld [vmem:[#allocation2 + $0x478] sm:$0xff]
    %v197 = vld [vmem:[#allocation2 + $0x480] sm:$0xff]
    %v198 = vld [vmem:[#allocation2 + $0x488] sm:$0xff]
    %v199 = vld [vmem:[#allocation2 + $0x490] sm:$0xff]
    %v200 = vld [vmem:[#allocation2 + $0x498] sm:$0xff]
    %v201 = vld [vmem:[#allocation2 + $0x4a0] sm:$0xff]
    %v202 = vld [vmem:[#allocation2 + $0x4a8] sm:$0xff]
    %v203 = vld [vmem:[#allocation2 + $0x4b0] sm:$0xff]
    %v204 = vld [vmem:[#allocation2 + $0x4b8] sm:$0xff]
    %v205 = vld [vmem:[#allocation2 + $0x4c0] sm:$0xff]
    %v206 = vld [vmem:[#allocation2 + $0x4c8] sm:$0xff]
    %v207 = vld [vmem:[#allocation2 + $0x4d0] sm:$0xff]
    %v208 = vld [vmem:[#allocation2 + $0x4d8] sm:$0xff]
    %v209 = vld [vmem:[#allocation2 + $0x4e0] sm:$0xff]
    %v210 = vld [vmem:[#allocation2 + $0x4e8] sm:$0xff]
    %v211 = vld [vmem:[#allocation2 + $0x4f0] sm:$0xff]
    %v212 = vld [vmem:[#allocation2 + $0x4f8] sm:$0xff]
    %v213 = vld [vmem:[#allocation2 + $0x500] sm:$0xff]
    %v214 = vld [vmem:[#allocation2 + $0x508] sm:$0xff]
    %v215 = vld [vmem:[#allocation2 + $0x510] sm:$0xff]
    %v216 = vld [vmem:[#allocation2 + $0x518] sm:$0xff]
    %v217 = vld [vmem:[#allocation2 + $0x520] sm:$0xff]
    %v218 = vld [vmem:[#allocation2 + $0x528] sm:$0xff]
    %v219 = vld [vmem:[#allocation2 + $0x530] sm:$0xff]
    %v220 = vld [vmem:[#allocation2 + $0x538] sm:$0xff]
    %v221 = vld [vmem:[#allocation2 + $0x540] sm:$0xff]
    %v222 = vld [vmem:[#allocation2 + $0x548] sm:$0xff]
    %v223 = vld [vmem:[#allocation2 + $0x550] sm:$0xff]
    %v224 = vld [vmem:[#allocation2 + $0x558] sm:$0xff]
    %v225 = vld [vmem:[#allocation2 + $0x560] sm:$0xff]
    %v226 = vld [vmem:[#allocation2 + $0x568] sm:$0xff]
    %v227 = vld [vmem:[#allocation2 + $0x570] sm:$0xff]
    %v228 = vld [vmem:[#allocation2 + $0x578] sm:$0xff]
    %v229 = vld [vmem:[#allocation2 + $0x580] sm:$0xff]
    %v230 = vld [vmem:[#allocation2 + $0x588] sm:$0xff]
    %v231 = vld [vmem:[#allocation2 + $0x590] sm:$0xff]
    %v232 = vld [vmem:[#allocation2 + $0x598] sm:$0xff]
    %v233 = vld [vmem:[#allocation2 + $0x5a0] sm:$0xff]
    %v234 = vld [vmem:[#allocation2 + $0x5a8] sm:$0xff]
    %v235 = vld [vmem:[#allocation2 + $0x5b0] sm:$0xff]
    %v236 = vld [vmem:[#allocation2 + $0x5b8] sm:$0xff]
    %v237 = vld [vmem:[#allocation2 + $0x5c0] sm:$0xff]
    %v238 = vld [vmem:[#allocation2 + $0x5c8] sm:$0xff]
    %v239 = vld [vmem:[#allocation2 + $0x5d0] sm:$0xff]
    %v240 = vld [vmem:[#allocation2 + $0x5d8] sm:$0xff]
    %v241 = vld [vmem:[#allocation2 + $0x5e0] sm:$0xff]
    %v242 = vld [vmem:[#allocation2 + $0x5e8] sm:$0xff]
    %v243 = vld [vmem:[#allocation2 + $0x5f0] sm:$0xff]
    %v244 = vld [vmem:[#allocation2 + $0x5f8] sm:$0xff]
    %v245 = vld [vmem:[#allocation2 + $0x600] sm:$0xff]
    %v246 = vld [vmem:[#allocation2 + $0x608] sm:$0xff]
    %v247 = vld [vmem:[#allocation2 + $0x610] sm:$0xff]
    %v248 = vld [vmem:[#allocation2 + $0x618] sm:$0xff]
    %v249 = vld [vmem:[#allocation2 + $0x620] sm:$0xff]
    %v250 = vld [vmem:[#allocation2 + $0x628] sm:$0xff]
    %v251 = vld [vmem:[#allocation2 + $0x630] sm:$0xff]
    %v252 = vld [vmem:[#allocation2 + $0x638] sm:$0xff]
    %v253 = vld [vmem:[#allocation2 + $0x640] sm:$0xff]
    %v254 = vld [vmem:[#allocation2 + $0x648] sm:$0xff]
    %v255 = vld [vmem:[#allocation2 + $0x650] sm:$0xff]
    %v256 = vld [vmem:[#allocation2 + $0x658] sm:$0xff]
    %v257 = vld [vmem:[#allocation2 + $0x660] sm:$0xff]
    %v258 = vld [vmem:[#allocation2 + $0x668] sm:$0xff]
    %v259 = vld [vmem:[#allocation2 + $0x670] sm:$0xff]
    %v260 = vld [vmem:[#allocation2 + $0x678] sm:$0xff]
    %v261 = vld [vmem:[#allocation2 + $0x680] sm:$0xff]
    %v262 = vld [vmem:[#allocation2 + $0x688] sm:$0xff]
    %v263 = vld [vmem:[#allocation2 + $0x690] sm:$0xff]
    %v264 = vld [vmem:[#allocation2 + $0x698] sm:$0xff]
    %v265 = vld [vmem:[#allocation2 + $0x6a0] sm:$0xff]
    %v266 = vld [vmem:[#allocation2 + $0x6a8] sm:$0xff]
    %v267 = vld [vmem:[#allocation2 + $0x6b0] sm:$0xff]
    %v268 = vld [vmem:[#allocation2 + $0x6b8] sm:$0xff]
    %v269 = vld [vmem:[#allocation2 + $0x6c0] sm:$0xff]
    %v270 = vld [vmem:[#allocation2 + $0x6c8] sm:$0xff]
    %v271 = vld [vmem:[#allocation2 + $0x6d0] sm:$0xff]
    %v272 = vld [vmem:[#allocation2 + $0x6d8] sm:$0xff]
    %v273 = vld [vmem:[#allocation2 + $0x6e0] sm:$0xff]
    %v274 = vld [vmem:[#allocation2 + $0x6e8] sm:$0xff]
    %v275 = vld [vmem:[#allocation2 + $0x6f0] sm:$0xff]
    %v276 = vld [vmem:[#allocation2 + $0x6f8] sm:$0xff]
    %v277 = vld [vmem:[#allocation2 + $0x700] sm:$0xff]
    %v278 = vld [vmem:[#allocation2 + $0x708] sm:$0xff]
    %v279 = vld [vmem:[#allocation2 + $0x710] sm:$0xff]
    %v280 = vld [vmem:[#allocation2 + $0x718] sm:$0xff]
    %v281 = vld [vmem:[#allocation2 + $0x720] sm:$0xff]
    %v282 = vld [vmem:[#allocation2 + $0x728] sm:$0xff]
    %v283 = vld [vmem:[#allocation2 + $0x730] sm:$0xff]
    %v284 = vld [vmem:[#allocation2 + $0x738] sm:$0xff]
    %v285 = vld [vmem:[#allocation2 + $0x740] sm:$0xff]
    %v286 = vld [vmem:[#allocation2 + $0x748] sm:$0xff]
    %v287 = vld [vmem:[#allocation2 + $0x750] sm:$0xff]
    %v288 = vld [vmem:[#allocation2 + $0x758] sm:$0xff]
    %v289 = vld [vmem:[#allocation2 + $0x760] sm:$0xff]
    %v290 = vld [vmem:[#allocation2 + $0x768] sm:$0xff]
    %v291 = vld [vmem:[#allocation2 + $0x770] sm:$0xff]
    %v292 = vld [vmem:[#allocation2 + $0x778] sm:$0xff]
    %v293 = vld [vmem:[#allocation2 + $0x780] sm:$0xff]
    %v294 = vld [vmem:[#allocation2 + $0x788] sm:$0xff]
    %v295 = vld [vmem:[#allocation2 + $0x790] sm:$0xff]
    %v296 = vld [vmem:[#allocation2 + $0x798] sm:$0xff]
    %v297 = vld [vmem:[#allocation2 + $0x7a0] sm:$0xff]
    %v298 = vld [vmem:[#allocation2 + $0x7a8] sm:$0xff]
    %v299 = vld [vmem:[#allocation2 + $0x7b0] sm:$0xff]
    %v300 = vld [vmem:[#allocation2 + $0x7b8] sm:$0xff]
    %v301 = vld [vmem:[#allocation2 + $0x7c0] sm:$0xff]
    %v302 = vld [vmem:[#allocation2 + $0x7c8] sm:$0xff]
    %v303 = vld [vmem:[#allocation2 + $0x7d0] sm:$0xff]
    %v304 = vld [vmem:[#allocation2 + $0x7d8] sm:$0xff]
    %v305 = vld [vmem:[#allocation2 + $0x7e0] sm:$0xff]
    %v306 = vld [vmem:[#allocation2 + $0x7e8] sm:$0xff]
    %v307 = vld [vmem:[#allocation2 + $0x7f0] sm:$0xff]
    %v308 = vld [vmem:[#allocation2 + $0x7f8] sm:$0xff]
    %v309 = vld [vmem:[#allocation2 + $0x800] sm:$0xff]
    %v310 = vld [vmem:[#allocation2 + $0x808] sm:$0xff]
    %v311 = vld [vmem:[#allocation2 + $0x810] sm:$0xff]
    %v312 = vld [vmem:[#allocation2 + $0x818] sm:$0xff]
    %v313 = vld [vmem:[#allocation2 + $0x820] sm:$0xff]
    %v314 = vld [vmem:[#allocation2 + $0x828] sm:$0xff]
    %v315 = vld [vmem:[#allocation2 + $0x830] sm:$0xff]
    %v316 = vld [vmem:[#allocation2 + $0x838] sm:$0xff]
    %v317 = vld [vmem:[#allocation2 + $0x840] sm:$0xff]
    %v318 = vld [vmem:[#allocation2 + $0x848] sm:$0xff]
    %v319 = vld [vmem:[#allocation2 + $0x850] sm:$0xff]
    %v320 = vld [vmem:[#allocation2 + $0x858] sm:$0xff]
    %v321 = vld [vmem:[#allocation2 + $0x860] sm:$0xff]
    %v322 = vld [vmem:[#allocation2 + $0x868] sm:$0xff]
    %v323 = vld [vmem:[#allocation2 + $0x870] sm:$0xff]
    %v324 = vld [vmem:[#allocation2 + $0x878] sm:$0xff]
    %v325 = vld [vmem:[#allocation2 + $0x880] sm:$0xff]
    %v326 = vld [vmem:[#allocation2 + $0x888] sm:$0xff]
    %v327 = vld [vmem:[#allocation2 + $0x890] sm:$0xff]
    %v328 = vld [vmem:[#allocation2 + $0x898] sm:$0xff]
    %v329 = vld [vmem:[#allocation2 + $0x8a0] sm:$0xff]
    %v330 = vld [vmem:[#allocation2 + $0x8a8] sm:$0xff]
    %v331 = vld [vmem:[#allocation2 + $0x8b0] sm:$0xff]
    %v332 = vld [vmem:[#allocation2 + $0x8b8] sm:$0xff]
    %v333 = vld [vmem:[#allocation2 + $0x8c0] sm:$0xff]
    %v334 = vld [vmem:[#allocation2 + $0x8c8] sm:$0xff]
    %v335 = vld [vmem:[#allocation2 + $0x8d0] sm:$0xff]
    %v336 = vld [vmem:[#allocation2 + $0x8d8] sm:$0xff]
    %v337 = vld [vmem:[#allocation2 + $0x8e0] sm:$0xff]
    %v338 = vld [vmem:[#allocation2 + $0x8e8] sm:$0xff]
    %v339 = vld [vmem:[#allocation2 + $0x8f0] sm:$0xff]
    %v340 = vld [vmem:[#allocation2 + $0x8f8] sm:$0xff]
    %v341 = vld [vmem:[#allocation4] sm:$0x3]
    %v343 = vperm.slane %v341, 0
    %v344 = vperm.slane %v341, 1
    %347 = vmatpush.msra.mxu0 %v83
    %348 = vmatpush.msra.mxu0 %v81
    %349 = vmatpush.msra.mxu0 %v79
    %350 = vmatpush.msra.mxu0 %v77
    %351 = vmatpush.msra.mxu0 %v75
    %352 = vmatpush.msra.mxu0 %v73
    %353 = vmatpush.msra.mxu0 %v71
    %354 = vmatpush.msra.mxu0 %v69
    %355 = vmatpush.msra.mxu0 %v67
    %356 = vmatpush.msra.mxu0 %v65
    %357 = vmatpush.msra.mxu0 %v63
    %358 = vmatpush.msra.mxu0 %v61
    %359 = vmatpush.msra.mxu0 %v59
    %360 = vmatpush.msra.mxu0 %v57
    %361 = vmatpush.msra.mxu0 %v55
    %362 = vmatpush.msra.mxu0 %v53
    %363 = vmatmul.f32.gmra.mxu0 %v44
    %v364 = vpop.f32.mrf.mxu0
    %v365 = vadd.f32 %v343, %v364
    %366 = vdwg.mxu0
    %367 = vmatpush.msra.mxu0 %v115
    %368 = vmatpush.msra.mxu0 %v113
    %369 = vmatpush.msra.mxu0 %v111
    %370 = vmatpush.msra.mxu0 %v109
    %371 = vmatpush.msra.mxu0 %v107
    %372 = vmatpush.msra.mxu0 %v105
    %373 = vmatpush.msra.mxu0 %v103
    %374 = vmatpush.msra.mxu0 %v101
    %375 = vmatpush.msra.mxu0 %v99
    %376 = vmatpush.msra.mxu0 %v97
    %377 = vmatpush.msra.mxu0 %v95
    %378 = vmatpush.msra.mxu0 %v93
    %379 = vmatpush.msra.mxu0 %v91
    %380 = vmatpush.msra.mxu0 %v89
    %381 = vmatpush.msra.mxu0 %v87
    %382 = vmatpush.msra.mxu0 %v85
    %383 = vmatmul.f32.gmra.mxu0 %v45
    %v384 = vpop.f32.mrf.mxu0
    %v385 = vadd.f32 %v365, %v384
    %386 = vdwg.mxu0
    %387 = vmatpush.msra.mxu0 %v147
    %388 = vmatpush.msra.mxu0 %v145
    %389 = vmatpush.msra.mxu0 %v143
    %390 = vmatpush.msra.mxu0 %v141
    %391 = vmatpush.msra.mxu0 %v139
    %392 = vmatpush.msra.mxu0 %v137
    %393 = vmatpush.msra.mxu0 %v135
    %394 = vmatpush.msra.mxu0 %v133
    %395 = vmatpush.msra.mxu0 %v131
    %396 = vmatpush.msra.mxu0 %v129
    %397 = vmatpush.msra.mxu0 %v127
    %398 = vmatpush.msra.mxu0 %v125
    %399 = vmatpush.msra.mxu0 %v123
    %400 = vmatpush.msra.mxu0 %v121
    %401 = vmatpush.msra.mxu0 %v119
    %402 = vmatpush.msra.mxu0 %v117
    %403 = vmatmul.f32.gmra.mxu0 %v46
    %v404 = vpop.f32.mrf.mxu0
    %v405 = vadd.f32 %v385, %v404
    %406 = vdwg.mxu0
    %407 = vmatpush.msra.mxu0 %v179
    %408 = vmatpush.msra.mxu0 %v177
    %409 = vmatpush.msra.mxu0 %v175
    %410 = vmatpush.msra.mxu0 %v173
    %411 = vmatpush.msra.mxu0 %v171
    %412 = vmatpush.msra.mxu0 %v169
    %413 = vmatpush.msra.mxu0 %v167
    %414 = vmatpush.msra.mxu0 %v165
    %415 = vmatpush.msra.mxu0 %v163
    %416 = vmatpush.msra.mxu0 %v161
    %417 = vmatpush.msra.mxu0 %v159
    %418 = vmatpush.msra.mxu0 %v157
    %419 = vmatpush.msra.mxu0 %v155
    %420 = vmatpush.msra.mxu0 %v153
    %421 = vmatpush.msra.mxu0 %v151
    %422 = vmatpush.msra.mxu0 %v149
    %423 = vmatmul.f32.gmra.mxu0 %v47
    %v424 = vpop.f32.mrf.mxu0
    %v425 = vadd.f32 %v405, %v424
    %426 = vdwg.mxu0
    %427 = vmatpush.msra.mxu0 %v211
    %428 = vmatpush.msra.mxu0 %v209
    %429 = vmatpush.msra.mxu0 %v207
    %430 = vmatpush.msra.mxu0 %v205
    %431 = vmatpush.msra.mxu0 %v203
    %432 = vmatpush.msra.mxu0 %v201
    %433 = vmatpush.msra.mxu0 %v199
    %434 = vmatpush.msra.mxu0 %v197
    %435 = vmatpush.msra.mxu0 %v195
    %436 = vmatpush.msra.mxu0 %v193
    %437 = vmatpush.msra.mxu0 %v191
    %438 = vmatpush.msra.mxu0 %v189
    %439 = vmatpush.msra.mxu0 %v187
    %440 = vmatpush.msra.mxu0 %v185
    %441 = vmatpush.msra.mxu0 %v183
    %442 = vmatpush.msra.mxu0 %v181
    %443 = vmatmul.f32.gmra.mxu0 %v48
    %v444 = vpop.f32.mrf.mxu0
    %v445 = vadd.f32 %v425, %v444
    %446 = vdwg.mxu0
    %447 = vmatpush.msra.mxu0 %v243
    %448 = vmatpush.msra.mxu0 %v241
    %449 = vmatpush.msra.mxu0 %v239
    %450 = vmatpush.msra.mxu0 %v237
    %451 = vmatpush.msra.mxu0 %v235
    %452 = vmatpush.msra.mxu0 %v233
    %453 = vmatpush.msra.mxu0 %v231
    %454 = vmatpush.msra.mxu0 %v229
    %455 = vmatpush.msra.mxu0 %v227
    %456 = vmatpush.msra.mxu0 %v225
    %457 = vmatpush.msra.mxu0 %v223
    %458 = vmatpush.msra.mxu0 %v221
    %459 = vmatpush.msra.mxu0 %v219
    %460 = vmatpush.msra.mxu0 %v217
    %461 = vmatpush.msra.mxu0 %v215
    %462 = vmatpush.msra.mxu0 %v213
    %463 = vmatmul.f32.gmra.mxu0 %v49
    %v464 = vpop.f32.mrf.mxu0
    %v465 = vadd.f32 %v445, %v464
    %466 = vdwg.mxu0
    %467 = vmatpush.msra.mxu0 %v275
    %468 = vmatpush.msra.mxu0 %v273
    %469 = vmatpush.msra.mxu0 %v271
    %470 = vmatpush.msra.mxu0 %v269
    %471 = vmatpush.msra.mxu0 %v267
    %472 = vmatpush.msra.mxu0 %v265
    %473 = vmatpush.msra.mxu0 %v263
    %474 = vmatpush.msra.mxu0 %v261
    %475 = vmatpush.msra.mxu0 %v259
    %476 = vmatpush.msra.mxu0 %v257
    %477 = vmatpush.msra.mxu0 %v255
    %478 = vmatpush.msra.mxu0 %v253
    %479 = vmatpush.msra.mxu0 %v251
    %480 = vmatpush.msra.mxu0 %v249
    %481 = vmatpush.msra.mxu0 %v247
    %482 = vmatpush.msra.mxu0 %v245
    %483 = vmatmul.f32.gmra.mxu0 %v50
    %v484 = vpop.f32.mrf.mxu0
    %v485 = vadd.f32 %v465, %v484
    %486 = vdwg.mxu0
    %487 = vmatpush.msra.mxu0 %v307
    %488 = vmatpush.msra.mxu0 %v305
    %489 = vmatpush.msra.mxu0 %v303
    %490 = vmatpush.msra.mxu0 %v301
    %491 = vmatpush.msra.mxu0 %v299
    %492 = vmatpush.msra.mxu0 %v297
    %493 = vmatpush.msra.mxu0 %v295
    %494 = vmatpush.msra.mxu0 %v293
    %495 = vmatpush.msra.mxu0 %v291
    %496 = vmatpush.msra.mxu0 %v289
    %497 = vmatpush.msra.mxu0 %v287
    %498 = vmatpush.msra.mxu0 %v285
    %499 = vmatpush.msra.mxu0 %v283
    %500 = vmatpush.msra.mxu0 %v281
    %501 = vmatpush.msra.mxu0 %v279
    %502 = vmatpush.msra.mxu0 %v277
    %503 = vmatmul.f32.gmra.mxu0 %v51
    %v504 = vpop.f32.mrf.mxu0
    %v505 = vadd.f32 %v485, %v504
    %506 = vdwg.mxu0
    %507 = vmatpush.msra.mxu0 %v339
    %508 = vmatpush.msra.mxu0 %v337
    %509 = vmatpush.msra.mxu0 %v335
    %510 = vmatpush.msra.mxu0 %v333
    %511 = vmatpush.msra.mxu0 %v331
    %512 = vmatpush.msra.mxu0 %v329
    %513 = vmatpush.msra.mxu0 %v327
    %514 = vmatpush.msra.mxu0 %v325
    %515 = vmatpush.msra.mxu0 %v323
    %516 = vmatpush.msra.mxu0 %v321
    %517 = vmatpush.msra.mxu0 %v319
    %518 = vmatpush.msra.mxu0 %v317
    %519 = vmatpush.msra.mxu0 %v315
    %520 = vmatpush.msra.mxu0 %v313
    %521 = vmatpush.msra.mxu0 %v311
    %522 = vmatpush.msra.mxu0 %v309
    %523 = vmatmul.f32.gmra.mxu0 %v52
    %v524 = vpop.f32.mrf.mxu0
    %v525 = vadd.f32 %v505, %v524
    %526 = vdwg.mxu0
    %527 = vmatpush.msra.mxu0 %v84
    %528 = vmatpush.msra.mxu0 %v82
    %529 = vmatpush.msra.mxu0 %v80
    %530 = vmatpush.msra.mxu0 %v78
    %531 = vmatpush.msra.mxu0 %v76
    %532 = vmatpush.msra.mxu0 %v74
    %533 = vmatpush.msra.mxu0 %v72
    %534 = vmatpush.msra.mxu0 %v70
    %535 = vmatpush.msra.mxu0 %v68
    %536 = vmatpush.msra.mxu0 %v66
    %537 = vmatpush.msra.mxu0 %v64
    %538 = vmatpush.msra.mxu0 %v62
    %539 = vmatpush.msra.mxu0 %v60
    %540 = vmatpush.msra.mxu0 %v58
    %541 = vmatpush.msra.mxu0 %v56
    %542 = vmatpush.msra.mxu0 %v54
    %543 = vmatmul.f32.gmra.mxu0 %v44
    %v544 = vpop.f32.mrf.mxu0
    %v545 = vadd.f32 %v344, %v544
    %546 = vdwg.mxu0
    %547 = vmatpush.msra.mxu0 %v116
    %548 = vmatpush.msra.mxu0 %v114
    %549 = vmatpush.msra.mxu0 %v112
    %550 = vmatpush.msra.mxu0 %v110
    %551 = vmatpush.msra.mxu0 %v108
    %552 = vmatpush.msra.mxu0 %v106
    %553 = vmatpush.msra.mxu0 %v104
    %554 = vmatpush.msra.mxu0 %v102
    %555 = vmatpush.msra.mxu0 %v100
    %556 = vmatpush.msra.mxu0 %v98
    %557 = vmatpush.msra.mxu0 %v96
    %558 = vmatpush.msra.mxu0 %v94
    %559 = vmatpush.msra.mxu0 %v92
    %560 = vmatpush.msra.mxu0 %v90
    %561 = vmatpush.msra.mxu0 %v88
    %562 = vmatpush.msra.mxu0 %v86
    %563 = vmatmul.f32.gmra.mxu0 %v45
    %v564 = vpop.f32.mrf.mxu0
    %v565 = vadd.f32 %v545, %v564
    %566 = vdwg.mxu0
    %567 = vmatpush.msra.mxu0 %v148
    %568 = vmatpush.msra.mxu0 %v146
    %569 = vmatpush.msra.mxu0 %v144
    %570 = vmatpush.msra.mxu0 %v142
    %571 = vmatpush.msra.mxu0 %v140
    %572 = vmatpush.msra.mxu0 %v138
    %573 = vmatpush.msra.mxu0 %v136
    %574 = vmatpush.msra.mxu0 %v134
    %575 = vmatpush.msra.mxu0 %v132
    %576 = vmatpush.msra.mxu0 %v130
    %577 = vmatpush.msra.mxu0 %v128
    %578 = vmatpush.msra.mxu0 %v126
    %579 = vmatpush.msra.mxu0 %v124
    %580 = vmatpush.msra.mxu0 %v122
    %581 = vmatpush.msra.mxu0 %v120
    %582 = vmatpush.msra.mxu0 %v118
    %583 = vmatmul.f32.gmra.mxu0 %v46
    %v584 = vpop.f32.mrf.mxu0
    %v585 = vadd.f32 %v565, %v584
    %586 = vdwg.mxu0
    %587 = vmatpush.msra.mxu0 %v180
    %588 = vmatpush.msra.mxu0 %v178
    %589 = vmatpush.msra.mxu0 %v176
    %590 = vmatpush.msra.mxu0 %v174
    %591 = vmatpush.msra.mxu0 %v172
    %592 = vmatpush.msra.mxu0 %v170
    %593 = vmatpush.msra.mxu0 %v168
    %594 = vmatpush.msra.mxu0 %v166
    %595 = vmatpush.msra.mxu0 %v164
    %596 = vmatpush.msra.mxu0 %v162
    %597 = vmatpush.msra.mxu0 %v160
    %598 = vmatpush.msra.mxu0 %v158
    %599 = vmatpush.msra.mxu0 %v156
    %600 = vmatpush.msra.mxu0 %v154
    %601 = vmatpush.msra.mxu0 %v152
    %602 = vmatpush.msra.mxu0 %v150
    %603 = vmatmul.f32.gmra.mxu0 %v47
    %v604 = vpop.f32.mrf.mxu0
    %v605 = vadd.f32 %v585, %v604
    %606 = vdwg.mxu0
    %607 = vmatpush.msra.mxu0 %v212
    %608 = vmatpush.msra.mxu0 %v210
    %609 = vmatpush.msra.mxu0 %v208
    %610 = vmatpush.msra.mxu0 %v206
    %611 = vmatpush.msra.mxu0 %v204
    %612 = vmatpush.msra.mxu0 %v202
    %613 = vmatpush.msra.mxu0 %v200
    %614 = vmatpush.msra.mxu0 %v198
    %615 = vmatpush.msra.mxu0 %v196
    %616 = vmatpush.msra.mxu0 %v194
    %617 = vmatpush.msra.mxu0 %v192
    %618 = vmatpush.msra.mxu0 %v190
    %619 = vmatpush.msra.mxu0 %v188
    %620 = vmatpush.msra.mxu0 %v186
    %621 = vmatpush.msra.mxu0 %v184
    %622 = vmatpush.msra.mxu0 %v182
    %623 = vmatmul.f32.gmra.mxu0 %v48
    %v624 = vpop.f32.mrf.mxu0
    %v625 = vadd.f32 %v605, %v624
    %626 = vdwg.mxu0
    %627 = vmatpush.msra.mxu0 %v244
    %628 = vmatpush.msra.mxu0 %v242
    %629 = vmatpush.msra.mxu0 %v240
    %630 = vmatpush.msra.mxu0 %v238
    %631 = vmatpush.msra.mxu0 %v236
    %632 = vmatpush.msra.mxu0 %v234
    %633 = vmatpush.msra.mxu0 %v232
    %634 = vmatpush.msra.mxu0 %v230
    %635 = vmatpush.msra.mxu0 %v228
    %636 = vmatpush.msra.mxu0 %v226
    %637 = vmatpush.msra.mxu0 %v224
    %638 = vmatpush.msra.mxu0 %v222
    %639 = vmatpush.msra.mxu0 %v220
    %640 = vmatpush.msra.mxu0 %v218
    %641 = vmatpush.msra.mxu0 %v216
    %642 = vmatpush.msra.mxu0 %v214
    %643 = vmatmul.f32.gmra.mxu0 %v49
    %v644 = vpop.f32.mrf.mxu0
    %v645 = vadd.f32 %v625, %v644
    %646 = vdwg.mxu0
    %647 = vmatpush.msra.mxu0 %v276
    %648 = vmatpush.msra.mxu0 %v274
    %649 = vmatpush.msra.mxu0 %v272
    %650 = vmatpush.msra.mxu0 %v270
    %651 = vmatpush.msra.mxu0 %v268
    %652 = vmatpush.msra.mxu0 %v266
    %653 = vmatpush.msra.mxu0 %v264
    %654 = vmatpush.msra.mxu0 %v262
    %655 = vmatpush.msra.mxu0 %v260
    %656 = vmatpush.msra.mxu0 %v258
    %657 = vmatpush.msra.mxu0 %v256
    %658 = vmatpush.msra.mxu0 %v254
    %659 = vmatpush.msra.mxu0 %v252
    %660 = vmatpush.msra.mxu0 %v250
    %661 = vmatpush.msra.mxu0 %v248
    %662 = vmatpush.msra.mxu0 %v246
    %663 = vmatmul.f32.gmra.mxu0 %v50
    %v664 = vpop.f32.mrf.mxu0
    %v665 = vadd.f32 %v645, %v664
    %666 = vdwg.mxu0
    %667 = vmatpush.msra.mxu0 %v308
    %668 = vmatpush.msra.mxu0 %v306
    %669 = vmatpush.msra.mxu0 %v304
    %670 = vmatpush.msra.mxu0 %v302
    %671 = vmatpush.msra.mxu0 %v300
    %672 = vmatpush.msra.mxu0 %v298
    %673 = vmatpush.msra.mxu0 %v296
    %674 = vmatpush.msra.mxu0 %v294
    %675 = vmatpush.msra.mxu0 %v292
    %676 = vmatpush.msra.mxu0 %v290
    %677 = vmatpush.msra.mxu0 %v288
    %678 = vmatpush.msra.mxu0 %v286
    %679 = vmatpush.msra.mxu0 %v284
    %680 = vmatpush.msra.mxu0 %v282
    %681 = vmatpush.msra.mxu0 %v280
    %682 = vmatpush.msra.mxu0 %v278
    %683 = vmatmul.f32.gmra.mxu0 %v51
    %v684 = vpop.f32.mrf.mxu0
    %v685 = vadd.f32 %v665, %v684
    %686 = vdwg.mxu0
    %687 = vmatpush.msra.mxu0 %v340
    %688 = vmatpush.msra.mxu0 %v338
    %689 = vmatpush.msra.mxu0 %v336
    %690 = vmatpush.msra.mxu0 %v334
    %691 = vmatpush.msra.mxu0 %v332
    %692 = vmatpush.msra.mxu0 %v330
    %693 = vmatpush.msra.mxu0 %v328
    %694 = vmatpush.msra.mxu0 %v326
    %695 = vmatpush.msra.mxu0 %v324
    %696 = vmatpush.msra.mxu0 %v322
    %697 = vmatpush.msra.mxu0 %v320
    %698 = vmatpush.msra.mxu0 %v318
    %699 = vmatpush.msra.mxu0 %v316
    %700 = vmatpush.msra.mxu0 %v314
    %701 = vmatpush.msra.mxu0 %v312
    %702 = vmatpush.msra.mxu0 %v310
    %703 = vmatmul.f32.gmra.mxu0 %v52
    %v704 = vpop.f32.mrf.mxu0
    %v705 = vadd.f32 %v685, %v704
    %706 = vdwg.mxu0
    %vm707 = vcmp.gt.f32.partialorder %v525, 0.0
    %vm708 = vcmp.gt.f32.partialorder %v705, 0.0
    %v709 = vmul.f32 %v525, 0.2
    %v710 = vmul.f32 %v705, 0.2
    %v711 = vsel %vm707, %v525, %v709
    %v712 = vsel %vm708, %v705, %v710
    %713 = vst [vmem:[%s3] sm:$0xff] %v711
    %714 = vst [vmem:[%s3 + $0x8] sm:$0xff] %v712
    // Predicated region
    $region22: #{_lambda_.5} parent=1 // pred_check
      _
    $region23: #{_lambda_.5} parent=1 // pred_check_branch
      %716 = sbr.rel (0) target = $region25
    $region24: #{_lambda_.5} parent=1 // pred_region
      _
    $region25: #{_lambda_.5} parent=1 // pred_fallthru
      _
    // Predicated region
    $region26: #{_lambda_.5} parent=1 // pred_check
      _
    $region27: #{_lambda_.5} parent=1 // pred_check_branch
      %718 = sbr.rel (0) target = $region29
    $region28: #{_lambda_.5} parent=1 // pred_region
      _
    $region29: #{_lambda_.5} parent=1 // pred_fallthru
      _
    %719 = vsyncpa [#allocation3], 1
    %720 = vsyncpa [#allocation5], 1

// kernel: _lambda_.7
$region0: #{_lambda_.7}
  #allocation0 [shape = 'u32[]', space=smem, size = 0x4, offset = 0x4, fixed_abs, tag = 'smem constant byte address 0x4 - core index']
  #allocation1 [shape = 'u32[72,128]{1,0:T(1,128)}', space=vmem, size = 0x9000, scoped, tag = 'internal scratch']
  %s0 = inlined_call_operand.vmem [shape: f32[128,288], index: 0, kind: input, shape index: {}]
  %s1 = inlined_call_operand.vmem [shape: f32[288,128], index: 1, kind: input, shape index: {}]
  %s2 = inlined_call_operand.vmem [shape: f32[1,128], index: 2, kind: input, shape index: {}]
  %s3 = inlined_call_operand.vmem [shape: f32[128,128], index: 3, kind: output, shape index: {}]
  %s4 = sld [smem:[#allocation0]]
  $region22: #{_lambda_.7} parent=0
    _
  %s6 = ssub.s32 1, %s4
  %s7 = scalar_select 0, %s6, %s4
  // Predicated region
  $region2: #{_lambda_.7} parent=0 // pred_check
    _
  $region3: #{_lambda_.7} parent=0 // pred_check_branch
    %9 = sbr.rel (0) target = $region5
  $region4: #{_lambda_.7} parent=0 // pred_region
    _
  $region5: #{_lambda_.7} parent=0 // pred_fallthru
    _
  // Predicated region
  $region6: #{_lambda_.7} parent=0 // pred_check
    _
  $region7: #{_lambda_.7} parent=0 // pred_check_branch
    %11 = sbr.rel (0) target = $region9
  $region8: #{_lambda_.7} parent=0 // pred_region
    _
  $region9: #{_lambda_.7} parent=0 // pred_fallthru
    _
  // Predicated region
  $region10: #{_lambda_.7} parent=0 // pred_check
    _
  $region11: #{_lambda_.7} parent=0 // pred_check_branch
    %13 = sbr.rel (0) target = $region13
  $region12: #{_lambda_.7} parent=0 // pred_region
    _
  $region13: #{_lambda_.7} parent=0 // pred_fallthru
    _
  %v14 = vld [vmem:[%s0] sm:$0xff]
  %v15 = vld [vmem:[%s0 + $0x8] sm:$0xff]
  %v16 = vld [vmem:[%s0 + $0x10] sm:$0xff]
  %v17 = vld [vmem:[%s0 + $0x18] sm:$0xff]
  %v18 = vld [vmem:[%s0 + $0x20] sm:$0xff]
  %v19 = vld [vmem:[%s0 + $0x28] sm:$0xff]
  %v20 = vld [vmem:[%s0 + $0x30] sm:$0xff]
  %v21 = vld [vmem:[%s0 + $0x38] sm:$0xff]
  %v22 = vld [vmem:[%s0 + $0x40] sm:$0xff]
  %v23 = vld [vmem:[%s0 + $0x48] sm:$0xff]
  %v24 = vld [vmem:[%s0 + $0x50] sm:$0xff]
  %v25 = vld [vmem:[%s0 + $0x58] sm:$0xff]
  %v26 = vld [vmem:[%s0 + $0x60] sm:$0xff]
  %v27 = vld [vmem:[%s0 + $0x68] sm:$0xff]
  %v28 = vld [vmem:[%s0 + $0x70] sm:$0xff]
  %v29 = vld [vmem:[%s0 + $0x78] sm:$0xff]
  %v30 = vld [vmem:[%s0 + $0x80] sm:$0xff]
  %v31 = vld [vmem:[%s0 + $0x88] sm:$0xff]
  %v32 = vld [vmem:[%s0 + $0x90] sm:$0xff]
  %v33 = vld [vmem:[%s0 + $0x98] sm:$0xff]
  %v34 = vld [vmem:[%s0 + $0xa0] sm:$0xff]
  %v35 = vld [vmem:[%s0 + $0xa8] sm:$0xff]
  %v36 = vld [vmem:[%s0 + $0xb0] sm:$0xff]
  %v37 = vld [vmem:[%s0 + $0xb8] sm:$0xff]
  %v38 = vld [vmem:[%s0 + $0xc0] sm:$0xff]
  %v39 = vld [vmem:[%s0 + $0xc8] sm:$0xff]
  %v40 = vld [vmem:[%s0 + $0xd0] sm:$0xff]
  %v41 = vld [vmem:[%s0 + $0xd8] sm:$0xff]
  %v42 = vld [vmem:[%s0 + $0xe0] sm:$0xff]
  %v43 = vld [vmem:[%s0 + $0xe8] sm:$0xff]
  %v44 = vld [vmem:[%s0 + $0xf0] sm:$0xff]
  %v45 = vld [vmem:[%s0 + $0xf8] sm:$0xff]
  %v46 = vld [vmem:[%s0 + $0x100] sm:$0xff]
  %v47 = vld [vmem:[%s0 + $0x108] sm:$0xff]
  %v48 = vld [vmem:[%s0 + $0x110] sm:$0xff]
  %v49 = vld [vmem:[%s0 + $0x118] sm:$0xff]
  %v50 = vld [vmem:[%s0 + $0x120] sm:$0xff]
  %v51 = vld [vmem:[%s0 + $0x128] sm:$0xff]
  %v52 = vld [vmem:[%s0 + $0x130] sm:$0xff]
  %v53 = vld [vmem:[%s0 + $0x138] sm:$0xff]
  %v54 = vld [vmem:[%s0 + $0x140] sm:$0xff]
  %v55 = vld [vmem:[%s0 + $0x148] sm:$0xff]
  %v56 = vld [vmem:[%s0 + $0x150] sm:$0xff]
  %v57 = vld [vmem:[%s0 + $0x158] sm:$0xff]
  %v58 = vld [vmem:[%s0 + $0x160] sm:$0xff]
  %v59 = vld [vmem:[%s0 + $0x168] sm:$0xff]
  %v60 = vld [vmem:[%s0 + $0x170] sm:$0xff]
  %v61 = vld [vmem:[%s0 + $0x178] sm:$0xff]
  %v62 = vld [vmem:[%s1] sm:$0xff]
  %v63 = vld [vmem:[%s1 + $0x8] sm:$0xff]
  %v64 = vld [vmem:[%s1 + $0x10] sm:$0xff]
  %v65 = vld [vmem:[%s1 + $0x18] sm:$0xff]
  %v66 = vld [vmem:[%s1 + $0x20] sm:$0xff]
  %v67 = vld [vmem:[%s1 + $0x28] sm:$0xff]
  %v68 = vld [vmem:[%s1 + $0x30] sm:$0xff]
  %v69 = vld [vmem:[%s1 + $0x38] sm:$0xff]
  %v70 = vld [vmem:[%s1 + $0x40] sm:$0xff]
  %v71 = vld [vmem:[%s1 + $0x48] sm:$0xff]
  %v72 = vld [vmem:[%s1 + $0x50] sm:$0xff]
  %v73 = vld [vmem:[%s1 + $0x58] sm:$0xff]
  %v74 = vld [vmem:[%s1 + $0x60] sm:$0xff]
  %v75 = vld [vmem:[%s1 + $0x68] sm:$0xff]
  %v76 = vld [vmem:[%s1 + $0x70] sm:$0xff]
  %v77 = vld [vmem:[%s1 + $0x78] sm:$0xff]
  %v78 = vld [vmem:[%s1 + $0x80] sm:$0xff]
  %v79 = vld [vmem:[%s1 + $0x88] sm:$0xff]
  %v80 = vld [vmem:[%s1 + $0x90] sm:$0xff]
  %v81 = vld [vmem:[%s1 + $0x98] sm:$0xff]
  %v82 = vld [vmem:[%s1 + $0xa0] sm:$0xff]
  %v83 = vld [vmem:[%s1 + $0xa8] sm:$0xff]
  %v84 = vld [vmem:[%s1 + $0xb0] sm:$0xff]
  %v85 = vld [vmem:[%s1 + $0xb8] sm:$0xff]
  %v86 = vld [vmem:[%s1 + $0xc0] sm:$0xff]
  %v87 = vld [vmem:[%s1 + $0xc8] sm:$0xff]
  %v88 = vld [vmem:[%s1 + $0xd0] sm:$0xff]
  %v89 = vld [vmem:[%s1 + $0xd8] sm:$0xff]
  %v90 = vld [vmem:[%s1 + $0xe0] sm:$0xff]
  %v91 = vld [vmem:[%s1 + $0xe8] sm:$0xff]
  %v92 = vld [vmem:[%s1 + $0xf0] sm:$0xff]
  %v93 = vld [vmem:[%s1 + $0xf8] sm:$0xff]
  %v94 = vld [vmem:[%s1 + $0x100] sm:$0xff]
  %v95 = vld [vmem:[%s1 + $0x108] sm:$0xff]
  %v96 = vld [vmem:[%s1 + $0x110] sm:$0xff]
  %v97 = vld [vmem:[%s1 + $0x118] sm:$0xff]
  %v98 = vld [vmem:[%s2] sm:$0x1]
  %v100 = vperm.slane %v98, 0
  %vm102 = vcmask 261120
  %v104 = vsel %vm102, %v16, 0
  %v107 = vsel %vm102, %v19, 0
  %v110 = vsel %vm102, %v22, 0
  %v113 = vsel %vm102, %v25, 0
  %v116 = vsel %vm102, %v28, 0
  %v119 = vsel %vm102, %v31, 0
  %v122 = vsel %vm102, %v34, 0
  %v125 = vsel %vm102, %v37, 0
  %v128 = vsel %vm102, %v40, 0
  %v131 = vsel %vm102, %v43, 0
  %v134 = vsel %vm102, %v46, 0
  %v137 = vsel %vm102, %v49, 0
  %v140 = vsel %vm102, %v52, 0
  %v143 = vsel %vm102, %v55, 0
  %v146 = vsel %vm102, %v58, 0
  %v149 = vsel %vm102, %v61, 0
  %151 = vmatpush.msra.mxu0 %v77
  %152 = vmatpush.msra.mxu0 %v76
  %153 = vmatpush.msra.mxu0 %v75
  %154 = vmatpush.msra.mxu0 %v74
  %155 = vmatpush.msra.mxu0 %v73
  %156 = vmatpush.msra.mxu0 %v72
  %157 = vmatpush.msra.mxu0 %v71
  %158 = vmatpush.msra.mxu0 %v70
  %159 = vmatpush.msra.mxu0 %v69
  %160 = vmatpush.msra.mxu0 %v68
  %161 = vmatpush.msra.mxu0 %v67
  %162 = vmatpush.msra.mxu0 %v66
  %163 = vmatpush.msra.mxu0 %v65
  %164 = vmatpush.msra.mxu0 %v64
  %165 = vmatpush.msra.mxu0 %v63
  %166 = vmatpush.msra.mxu0 %v62
  %167 = vmatmul.f32.gmra.mxu0 %v14
  %v168 = vpop.f32.mrf.mxu0
  %v169 = vadd.f32 %v100, %v168
  %170 = vmatmul.f32.gmra.mxu0 %v17
  %v171 = vpop.f32.mrf.mxu0
  %v172 = vadd.f32 %v100, %v171
  %173 = vmatmul.f32.gmra.mxu0 %v20
  %v174 = vpop.f32.mrf.mxu0
  %v175 = vadd.f32 %v100, %v174
  %176 = vmatmul.f32.gmra.mxu0 %v23
  %v177 = vpop.f32.mrf.mxu0
  %v178 = vadd.f32 %v100, %v177
  %179 = vmatmul.f32.gmra.mxu0 %v26
  %v180 = vpop.f32.mrf.mxu0
  %v181 = vadd.f32 %v100, %v180
  %182 = vmatmul.f32.gmra.mxu0 %v29
  %v183 = vpop.f32.mrf.mxu0
  %v184 = vadd.f32 %v100, %v183
  %185 = vmatmul.f32.gmra.mxu0 %v32
  %v186 = vpop.f32.mrf.mxu0
  %v187 = vadd.f32 %v100, %v186
  %188 = vmatmul.f32.gmra.mxu0 %v35
  %v189 = vpop.f32.mrf.mxu0
  %v190 = vadd.f32 %v100, %v189
  %191 = vmatmul.f32.gmra.mxu0 %v38
  %v192 = vpop.f32.mrf.mxu0
  %v193 = vadd.f32 %v100, %v192
  %194 = vmatmul.f32.gmra.mxu0 %v41
  %v195 = vpop.f32.mrf.mxu0
  %v196 = vadd.f32 %v100, %v195
  %197 = vmatmul.f32.gmra.mxu0 %v44
  %v198 = vpop.f32.mrf.mxu0
  %v199 = vadd.f32 %v100, %v198
  %200 = vmatmul.f32.gmra.mxu0 %v47
  %v201 = vpop.f32.mrf.mxu0
  %v202 = vadd.f32 %v100, %v201
  %203 = vmatmul.f32.gmra.mxu0 %v50
  %v204 = vpop.f32.mrf.mxu0
  %v205 = vadd.f32 %v100, %v204
  %206 = vmatmul.f32.gmra.mxu0 %v53
  %v207 = vpop.f32.mrf.mxu0
  %v208 = vadd.f32 %v100, %v207
  %209 = vmatmul.f32.gmra.mxu0 %v56
  %v210 = vpop.f32.mrf.mxu0
  %v211 = vadd.f32 %v100, %v210
  %212 = vmatmul.f32.gmra.mxu0 %v59
  %v213 = vpop.f32.mrf.mxu0
  %v214 = vadd.f32 %v100, %v213
  %215 = vdwg.mxu0
  %216 = vmatpush.msra.mxu0 %v93
  %217 = vmatpush.msra.mxu0 %v92
  %218 = vmatpush.msra.mxu0 %v91
  %219 = vmatpush.msra.mxu0 %v90
  %220 = vmatpush.msra.mxu0 %v89
  %221 = vmatpush.msra.mxu0 %v88
  %222 = vmatpush.msra.mxu0 %v87
  %223 = vmatpush.msra.mxu0 %v86
  %224 = vmatpush.msra.mxu0 %v85
  %225 = vmatpush.msra.mxu0 %v84
  %226 = vmatpush.msra.mxu0 %v83
  %227 = vmatpush.msra.mxu0 %v82
  %228 = vmatpush.msra.mxu0 %v81
  %229 = vmatpush.msra.mxu0 %v80
  %230 = vmatpush.msra.mxu0 %v79
  %231 = vmatpush.msra.mxu0 %v78
  %232 = vmatmul.f32.gmra.mxu0 %v15
  %v233 = vpop.f32.mrf.mxu0
  %v234 = vadd.f32 %v169, %v233
  %235 = vmatmul.f32.gmra.mxu0 %v18
  %v236 = vpop.f32.mrf.mxu0
  %v237 = vadd.f32 %v172, %v236
  %238 = vmatmul.f32.gmra.mxu0 %v21
  %v239 = vpop.f32.mrf.mxu0
  %v240 = vadd.f32 %v175, %v239
  %241 = vmatmul.f32.gmra.mxu0 %v24
  %v242 = vpop.f32.mrf.mxu0
  %v243 = vadd.f32 %v178, %v242
  %244 = vmatmul.f32.gmra.mxu0 %v27
  %v245 = vpop.f32.mrf.mxu0
  %v246 = vadd.f32 %v181, %v245
  %247 = vmatmul.f32.gmra.mxu0 %v30
  %v248 = vpop.f32.mrf.mxu0
  %v249 = vadd.f32 %v184, %v248
  %250 = vmatmul.f32.gmra.mxu0 %v33
  %v251 = vpop.f32.mrf.mxu0
  %v252 = vadd.f32 %v187, %v251
  %253 = vmatmul.f32.gmra.mxu0 %v36
  %v254 = vpop.f32.mrf.mxu0
  %v255 = vadd.f32 %v190, %v254
  %256 = vmatmul.f32.gmra.mxu0 %v39
  %v257 = vpop.f32.mrf.mxu0
  %v258 = vadd.f32 %v193, %v257
  %259 = vmatmul.f32.gmra.mxu0 %v42
  %v260 = vpop.f32.mrf.mxu0
  %v261 = vadd.f32 %v196, %v260
  %262 = vmatmul.f32.gmra.mxu0 %v45
  %v263 = vpop.f32.mrf.mxu0
  %v264 = vadd.f32 %v199, %v263
  %265 = vmatmul.f32.gmra.mxu0 %v48
  %v266 = vpop.f32.mrf.mxu0
  %v267 = vadd.f32 %v202, %v266
  %268 = vmatmul.f32.gmra.mxu0 %v51
  %v269 = vpop.f32.mrf.mxu0
  %v270 = vadd.f32 %v205, %v269
  %271 = vmatmul.f32.gmra.mxu0 %v54
  %v272 = vpop.f32.mrf.mxu0
  %v273 = vadd.f32 %v208, %v272
  %274 = vmatmul.f32.gmra.mxu0 %v57
  %v275 = vpop.f32.mrf.mxu0
  %v276 = vadd.f32 %v211, %v275
  %277 = vmatmul.f32.gmra.mxu0 %v60
  %v278 = vpop.f32.mrf.mxu0
  %v279 = vadd.f32 %v214, %v278
  %280 = vdwg.mxu0
  %281 = vmatpush.msra.mxu0 0.0
  %282 = vmatpush.msra.mxu0 0.0
  %283 = vmatpush.msra.mxu0 0.0
  %284 = vmatpush.msra.mxu0 0.0
  %285 = vmatpush.msra.mxu0 0.0
  %286 = vmatpush.msra.mxu0 0.0
  %287 = vmatpush.msra.mxu0 0.0
  %288 = vmatpush.msra.mxu0 0.0
  %289 = vmatpush.msra.mxu0 0.0
  %290 = vmatpush.msra.mxu0 0.0
  %291 = vmatpush.msra.mxu0 0.0
  %292 = vmatpush.msra.mxu0 0.0
  %293 = vmatpush.msra.mxu0 %v97
  %294 = vmatpush.msra.mxu0 %v96
  %295 = vmatpush.msra.mxu0 %v95
  %296 = vmatpush.msra.mxu0 %v94
  %297 = vmatmul.f32.gmra.mxu0 %v104
  %v298 = vpop.f32.mrf.mxu0
  %v299 = vadd.f32 %v234, %v298
  %300 = vmatmul.f32.gmra.mxu0 %v107
  %v301 = vpop.f32.mrf.mxu0
  %v302 = vadd.f32 %v237, %v301
  %303 = vmatmul.f32.gmra.mxu0 %v110
  %v304 = vpop.f32.mrf.mxu0
  %v305 = vadd.f32 %v240, %v304
  %306 = vmatmul.f32.gmra.mxu0 %v113
  %v307 = vpop.f32.mrf.mxu0
  %v308 = vadd.f32 %v243, %v307
  %309 = vmatmul.f32.gmra.mxu0 %v116
  %v310 = vpop.f32.mrf.mxu0
  %v311 = vadd.f32 %v246, %v310
  %312 = vmatmul.f32.gmra.mxu0 %v119
  %v313 = vpop.f32.mrf.mxu0
  %v314 = vadd.f32 %v249, %v313
  %315 = vmatmul.f32.gmra.mxu0 %v122
  %v316 = vpop.f32.mrf.mxu0
  %v317 = vadd.f32 %v252, %v316
  %318 = vmatmul.f32.gmra.mxu0 %v125
  %v319 = vpop.f32.mrf.mxu0
  %v320 = vadd.f32 %v255, %v319
  %321 = vmatmul.f32.gmra.mxu0 %v128
  %v322 = vpop.f32.mrf.mxu0
  %v323 = vadd.f32 %v258, %v322
  %324 = vmatmul.f32.gmra.mxu0 %v131
  %v325 = vpop.f32.mrf.mxu0
  %v326 = vadd.f32 %v261, %v325
  %327 = vmatmul.f32.gmra.mxu0 %v134
  %v328 = vpop.f32.mrf.mxu0
  %v329 = vadd.f32 %v264, %v328
  %330 = vmatmul.f32.gmra.mxu0 %v137
  %v331 = vpop.f32.mrf.mxu0
  %v332 = vadd.f32 %v267, %v331
  %333 = vmatmul.f32.gmra.mxu0 %v140
  %v334 = vpop.f32.mrf.mxu0
  %v335 = vadd.f32 %v270, %v334
  %336 = vmatmul.f32.gmra.mxu0 %v143
  %v337 = vpop.f32.mrf.mxu0
  %v338 = vadd.f32 %v273, %v337
  %339 = vmatmul.f32.gmra.mxu0 %v146
  %v340 = vpop.f32.mrf.mxu0
  %v341 = vadd.f32 %v276, %v340
  %342 = vmatmul.f32.gmra.mxu0 %v149
  %v343 = vpop.f32.mrf.mxu0
  %v344 = vadd.f32 %v279, %v343
  %345 = vdwg.mxu0
  %v346 = vsub.f32 0.0, %v299
  %v347 = vsub.f32 0.0, %v302
  %v348 = vsub.f32 0.0, %v305
  %v349 = vsub.f32 0.0, %v308
  %v350 = vsub.f32 0.0, %v311
  %v351 = vsub.f32 0.0, %v314
  %v352 = vsub.f32 0.0, %v317
  %v353 = vsub.f32 0.0, %v320
  %v354 = vsub.f32 0.0, %v323
  %v355 = vsub.f32 0.0, %v326
  %v356 = vsub.f32 0.0, %v329
  %v357 = vsub.f32 0.0, %v332
  %v358 = vsub.f32 0.0, %v335
  %v359 = vsub.f32 0.0, %v338
  %v360 = vsub.f32 0.0, %v341
  %v361 = vsub.f32 0.0, %v344
  %v362 = vmul.f32 %v346, 1.442695
  %v363 = vpow.pop %v362
  %v364 = vmul.f32 %v347, 1.442695
  %v365 = vpow.pop %v364
  %v366 = vmul.f32 %v348, 1.442695
  %v367 = vpow.pop %v366
  %v368 = vmul.f32 %v349, 1.442695
  %v369 = vpow.pop %v368
  %v370 = vmul.f32 %v350, 1.442695
  %v371 = vpow.pop %v370
  %v372 = vmul.f32 %v351, 1.442695
  %v373 = vpow.pop %v372
  %v374 = vmul.f32 %v352, 1.442695
  %v375 = vpow.pop %v374
  %v376 = vmul.f32 %v353, 1.442695
  %v377 = vpow.pop %v376
  %v378 = vmul.f32 %v354, 1.442695
  %v379 = vpow.pop %v378
  %v380 = vmul.f32 %v355, 1.442695
  %v381 = vpow.pop %v380
  %v382 = vmul.f32 %v356, 1.442695
  %v383 = vpow.pop %v382
  %v384 = vmul.f32 %v357, 1.442695
  %v385 = vpow.pop %v384
  %v386 = vmul.f32 %v358, 1.442695
  %v387 = vpow.pop %v386
  %v388 = vmul.f32 %v359, 1.442695
  %v389 = vpow.pop %v388
  %v390 = vmul.f32 %v360, 1.442695
  %v391 = vpow.pop %v390
  %v392 = vmul.f32 %v361, 1.442695
  %v393 = vpow.pop %v392
  %v394 = vadd.f32 %v363, 1.0
  %v395 = vadd.f32 %v365, 1.0
  %v396 = vadd.f32 %v367, 1.0
  %v397 = vadd.f32 %v369, 1.0
  %v398 = vadd.f32 %v371, 1.0
  %v399 = vadd.f32 %v373, 1.0
  %v400 = vadd.f32 %v375, 1.0
  %v401 = vadd.f32 %v377, 1.0
  %v402 = vadd.f32 %v379, 1.0
  %v403 = vadd.f32 %v381, 1.0
  %v404 = vadd.f32 %v383, 1.0
  %v405 = vadd.f32 %v385, 1.0
  %v406 = vadd.f32 %v387, 1.0
  %v407 = vadd.f32 %v389, 1.0
  %v408 = vadd.f32 %v391, 1.0
  %v409 = vadd.f32 %v393, 1.0
  %v410 = vrcp.pop %v394
  %v411 = vrcp.pop %v395
  %v412 = vrcp.pop %v396
  %v413 = vrcp.pop %v397
  %v414 = vrcp.pop %v398
  %v415 = vrcp.pop %v399
  %v416 = vrcp.pop %v400
  %v417 = vrcp.pop %v401
  %v418 = vrcp.pop %v402
  %v419 = vrcp.pop %v403
  %v420 = vrcp.pop %v404
  %v421 = vrcp.pop %v405
  %v422 = vrcp.pop %v406
  %v423 = vrcp.pop %v407
  %v424 = vrcp.pop %v408
  %v425 = vrcp.pop %v409
  %426 = vst [vmem:[%s3] sm:$0xff] %v410
  %427 = vst [vmem:[%s3 + $0x8] sm:$0xff] %v411
  %428 = vst [vmem:[%s3 + $0x10] sm:$0xff] %v412
  %429 = vst [vmem:[%s3 + $0x18] sm:$0xff] %v413
  %430 = vst [vmem:[%s3 + $0x20] sm:$0xff] %v414
  %431 = vst [vmem:[%s3 + $0x28] sm:$0xff] %v415
  %432 = vst [vmem:[%s3 + $0x30] sm:$0xff] %v416
  %433 = vst [vmem:[%s3 + $0x38] sm:$0xff] %v417
  %434 = vst [vmem:[%s3 + $0x40] sm:$0xff] %v418
  %435 = vst [vmem:[%s3 + $0x48] sm:$0xff] %v419
  %436 = vst [vmem:[%s3 + $0x50] sm:$0xff] %v420
  %437 = vst [vmem:[%s3 + $0x58] sm:$0xff] %v421
  %438 = vst [vmem:[%s3 + $0x60] sm:$0xff] %v422
  %439 = vst [vmem:[%s3 + $0x68] sm:$0xff] %v423
  %440 = vst [vmem:[%s3 + $0x70] sm:$0xff] %v424
  %441 = vst [vmem:[%s3 + $0x78] sm:$0xff] %v425
  // Predicated region
  $region14: #{_lambda_.7} parent=0 // pred_check
    _
  $region15: #{_lambda_.7} parent=0 // pred_check_branch
    %443 = sbr.rel (0) target = $region17
  $region16: #{_lambda_.7} parent=0 // pred_region
    _
  $region17: #{_lambda_.7} parent=0 // pred_fallthru
    _
  // Predicated region
  $region18: #{_lambda_.7} parent=0 // pred_check
    _
  $region19: #{_lambda_.7} parent=0 // pred_check_branch
    %445 = sbr.rel (0) target = $region21
  $region20: #{_lambda_.7} parent=0 // pred_region
    _
  $region21: #{_lambda_.7} parent=0 // pred_fallthru
    _

</llo_original>
